<compile_context>
chip_gen: v5e
topology: v5e:2x2
jax: 0.10.0
libtpu: 0.0.40
codegen_flags: <defaults>
</compile_context>

<pallas_src>
import functools

import jax
import jax.numpy as jnp
from jax.experimental import pallas as pl
from jax.experimental.pallas import tpu as pltpu

NUM_CLASSES = 5
IN_CHANNELS = 6
EMBED_DIMS = 64          # hidden size H
NUM_LAYERS = 2
INIT_STD = 0.02
DEC_PAD = 128            # lane-dense padded decoder output width


def _lstm_cls_kernel(x_ref,        # (T*B, C)   time-major flattened input
                     wih0_ref,     # (C, 4H)
                     whh0_ref,     # (H, 4H)
                     b0_ref,       # (1, 4H)    b_ih0 + b_hh0
                     wcat1_ref,    # (2H, 4H)   [w_ih1^T ; w_hh1^T]
                     b1_ref,       # (1, 4H)    b_ih1 + b_hh1
                     wdec_ref,     # (H, DEC_PAD) zero-padded decoder weight
                     bdec_ref,     # (1, DEC_PAD) zero-padded decoder bias
                     out_ref,      # (B, DEC_PAD)
                     *, T, B):
    H = whh0_ref.shape[0]

    whh0 = whh0_ref[...]
    wcat1 = wcat1_ref[...]
    b1 = b1_ref[...]

    # Hoisted layer-0 input projection for ALL timesteps in one matmul.
    x0_all = (jnp.dot(x_ref[...], wih0_ref[...],
                      preferred_element_type=jnp.float32)
              + b0_ref[...])                              # (T*B, 4H)

    def activations(gates):
        # Two wide EUP pushes over the full (B, 4H) tile, then slice columns
        # (PyTorch gate order i, f, g, o).
        s = jax.nn.sigmoid(gates)
        t = jnp.tanh(gates)
        i = s[:, 0 * H:1 * H]
        f = s[:, 1 * H:2 * H]
        g = t[:, 2 * H:3 * H]
        o = s[:, 3 * H:4 * H]
        return i, f, g, o

    h0 = c0 = h1 = c1 = jnp.zeros((B, H), jnp.float32)

    # T is static and small -> fully unrolled recurrence.
    for t in range(T):
        # ---- layer 0: recurrent matmul only (input part precomputed) ----
        gates0 = (x0_all[t * B:(t + 1) * B, :]
                  + jnp.dot(h0, whh0, preferred_element_type=jnp.float32))
        i0, f0, g0, o0 = activations(gates0)
        c0 = f0 * c0 + i0 * g0
        h0 = o0 * jnp.tanh(c0)

        # ---- layer 1: fused input+recurrent matmul (K = 2H = 128) ----
        hcat = jnp.concatenate([h0, h1], axis=1)          # (B, 2H)
        gates1 = (jnp.dot(hcat, wcat1, preferred_element_type=jnp.float32)
                  + b1)
        i1, f1, g1, o1 = activations(gates1)
        c1 = f1 * c1 + i1 * g1
        h1 = o1 * jnp.tanh(c1)

    # Lane-dense (padded) decoder output.
    out_ref[...] = (jnp.dot(h1, wdec_ref[...],
                            preferred_element_type=jnp.float32)
                    + bdec_ref[...])


# -------------------- parameter packing for the kernel --------------------

def pack_params(params):
    """Repack raw PyTorch-layout params into kernel operand layout."""
    H = EMBED_DIMS
    wdec_pad = jnp.zeros((H, DEC_PAD), jnp.float32)
    wdec_pad = wdec_pad.at[:, :NUM_CLASSES].set(params["w_dec"].T)
    bdec_pad = jnp.zeros((1, DEC_PAD), jnp.float32)
    bdec_pad = bdec_pad.at[0, :NUM_CLASSES].set(params["b_dec"])
    return {
        "wih0_T": params["w_ih0"].T,                               # (C, 4H)
        "whh0_T": params["w_hh0"].T,                               # (H, 4H)
        "b0": (params["b_ih0"] + params["b_hh0"]).reshape(1, 4 * H),
        "wcat1": jnp.concatenate(
            [params["w_ih1"].T, params["w_hh1"].T], axis=0),       # (2H, 4H)
        "b1": (params["b_ih1"] + params["b_hh1"]).reshape(1, 4 * H),
        "wdec_pad": wdec_pad,
        "bdec_pad": bdec_pad,
    }


def lstm_classification_forward(x, params):
    """x: (B, T, C) float32, batch_first (same as the PyTorch module)."""
    B, T, C = x.shape
    # Time-major, flattened so the kernel does a single hoisted projection.
    x_flat = jnp.transpose(x, (1, 0, 2)).reshape(T * B, C)

    p = pack_params(params)
    operands = (
        x_flat,
        p["wih0_T"], p["whh0_T"], p["b0"],
        p["wcat1"], p["b1"],
        p["wdec_pad"], p["bdec_pad"],
    )
    vmem = pl.BlockSpec(memory_space=pltpu.MemorySpace.VMEM)
    out_pad = pl.pallas_call(
        functools.partial(_lstm_cls_kernel, T=T, B=B),
        out_shape=jax.ShapeDtypeStruct((B, DEC_PAD), jnp.float32),
        in_specs=[vmem] * len(operands),
        out_specs=vmem,
    )(*operands)
    return out_pad[:, :NUM_CLASSES]


# -------------------- deterministic parameter init --------------------

def _xavier_uniform(key, shape):
    fan_out, fan_in = shape            # PyTorch 2D convention: (out, in)
    limit = (6.0 / (fan_in + fan_out)) ** 0.5
    return jax.random.uniform(key, shape, jnp.float32, -limit, limit)


def _bias_uniform(key, shape, hidden):
    bound = 1.0 / (hidden ** 0.5)
    return jax.random.uniform(key, shape, jnp.float32, -bound, bound)


def init_params(key):
    H, C, NC = EMBED_DIMS, IN_CHANNELS, NUM_CLASSES
    ks = jax.random.split(key, 12)
    return {
        # Layer 0
        "w_ih0": _xavier_uniform(ks[0], (4 * H, C)),
        "w_hh0": _xavier_uniform(ks[1], (4 * H, H)),
        "b_ih0": _bias_uniform(ks[2], (4 * H,), H),
        "b_hh0": _bias_uniform(ks[3], (4 * H,), H),
        # Layer 1
        "w_ih1": _xavier_uniform(ks[4], (4 * H, H)),
        "w_hh1": _xavier_uniform(ks[5], (4 * H, H)),
        "b_ih1": _bias_uniform(ks[6], (4 * H,), H),
        "b_hh1": _bias_uniform(ks[7], (4 * H,), H),
        # Decoder: trunc_normal(std=0.02) weight, default Linear uniform bias
        "w_dec": INIT_STD * jax.random.truncated_normal(
            ks[8], -2.0, 2.0, (NC, H), jnp.float32),
        "b_dec": _bias_uniform(ks[9], (NC,), H),
    }


# -------------------- pure-JAX reference for verification --------------------

def reference_forward(x, params):
    B, T, C = x.shape
    H = EMBED_DIMS

    def cell(x_t, h, c, w_ih, w_hh, b_ih, b_hh):
        gates = x_t @ w_ih.T + b_ih + h @ w_hh.T + b_hh
        i = jax.nn.sigmoid(gates[:, 0 * H:1 * H])
        f = jax.nn.sigmoid(gates[:, 1 * H:2 * H])
        g = jnp.tanh(gates[:, 2 * H:3 * H])
        o = jax.nn.sigmoid(gates[:, 3 * H:4 * H])
        c = f * c + i * g
        h = o * jnp.tanh(c)
        return h, c

    h0 = c0 = h1 = c1 = jnp.zeros((B, H), jnp.float32)
    for t in range(T):
        x_t = x[:, t, :]
        h0, c0 = cell(x_t, h0, c0, params["w_ih0"], params["w_hh0"],
                      params["b_ih0"], params["b_hh0"])
        h1, c1 = cell(h0, h1, c1, params["w_ih1"], params["w_hh1"],
                      params["b_ih1"], params["b_hh1"])
    return h1 @ params["w_dec"].T + params["b_dec"]


if __name__ == "__main__":
    key = jax.random.PRNGKey(0)
    k_param, k_x = jax.random.split(key)

    B, T, C = 4, 8, IN_CHANNELS
    x = jax.random.normal(k_x, (B, T, C), jnp.float32)
    params = init_params(k_param)

    logits = lstm_classification_forward(x, params)
    jax.block_until_ready(logits)

    ref = reference_forward(x, params)
    assert logits.shape == (B, NUM_CLASSES)
    assert jnp.allclose(logits, ref, atol=2e-5, rtol=1e-5), (
        f"max abs diff = {jnp.max(jnp.abs(logits - ref))}")

    print("KERNEL_OK")
</pallas_src>

<mosaic_0001>
module attributes {stable_mosaic.version = 11 : i64} {
  func.func @_lstm_cls_kernel(%arg0: memref<32x6xf32, #tpu.memory_space<vmem>>, %arg1: memref<6x256xf32, #tpu.memory_space<vmem>>, %arg2: memref<64x256xf32, #tpu.memory_space<vmem>>, %arg3: memref<1x256xf32, #tpu.memory_space<vmem>>, %arg4: memref<128x256xf32, #tpu.memory_space<vmem>>, %arg5: memref<1x256xf32, #tpu.memory_space<vmem>>, %arg6: memref<64x128xf32, #tpu.memory_space<vmem>>, %arg7: memref<1x128xf32, #tpu.memory_space<vmem>>, %arg8: memref<4x128xf32, #tpu.memory_space<vmem>>) attributes {dimension_semantics = [], scalar_prefetch = 0 : i64, scratch_operands = 0 : i64, tpu.core_type = #tpu.core_type<tc>} {
    %c0 = arith.constant 0 : index
    %c0_0 = arith.constant 0 : index
    %0 = vector.load %arg2[%c0, %c0_0] : memref<64x256xf32, #tpu.memory_space<vmem>>, vector<64x256xf32>
    %c0_1 = arith.constant 0 : index
    %c0_2 = arith.constant 0 : index
    %1 = vector.load %arg4[%c0_1, %c0_2] : memref<128x256xf32, #tpu.memory_space<vmem>>, vector<128x256xf32>
    %c0_3 = arith.constant 0 : index
    %c0_4 = arith.constant 0 : index
    %2 = vector.load %arg5[%c0_3, %c0_4] : memref<1x256xf32, #tpu.memory_space<vmem>>, vector<1x256xf32>
    %c0_5 = arith.constant 0 : index
    %c0_6 = arith.constant 0 : index
    %3 = vector.load %arg0[%c0_5, %c0_6] : memref<32x6xf32, #tpu.memory_space<vmem>>, vector<32x6xf32>
    %c0_7 = arith.constant 0 : index
    %c0_8 = arith.constant 0 : index
    %4 = vector.load %arg1[%c0_7, %c0_8] : memref<6x256xf32, #tpu.memory_space<vmem>>, vector<6x256xf32>
    %cst = arith.constant dense<0.000000e+00> : vector<32x256xf32>
    %5 = tpu.matmul %3, %4, %cst {dimension_numbers = #tpu.dot_dimension_numbers<[1], [0], [0], [1], [0, 0, 1, 1], [], []>} : vector<32x6xf32>, vector<6x256xf32>, vector<32x256xf32> -> vector<32x256xf32>
    %c0_9 = arith.constant 0 : index
    %c0_10 = arith.constant 0 : index
    %6 = vector.load %arg3[%c0_9, %c0_10] : memref<1x256xf32, #tpu.memory_space<vmem>>, vector<1x256xf32>
    %7 = vector.broadcast %6 : vector<1x256xf32> to vector<32x256xf32>
    %8 = arith.addf %5, %7 : vector<32x256xf32>
    %cst_11 = arith.constant 0.000000e+00 : f32
    %9 = vector.broadcast %cst_11 : f32 to vector<4x64xf32>
    %10 = vector.extract_strided_slice %8 {offsets = [0, 0], sizes = [4, 256], strides = [1, 1]} : vector<32x256xf32> to vector<4x256xf32>
    %cst_12 = arith.constant dense<0.000000e+00> : vector<4x256xf32>
    %11 = tpu.matmul %9, %0, %cst_12 {dimension_numbers = #tpu.dot_dimension_numbers<[1], [0], [0], [1], [0, 0, 1, 1], [], []>} : vector<4x64xf32>, vector<64x256xf32>, vector<4x256xf32> -> vector<4x256xf32>
    %12 = arith.addf %10, %11 : vector<4x256xf32>
    %13 = arith.negf %12 : vector<4x256xf32>
    %14 = math.exp %13 : vector<4x256xf32>
    %cst_13 = arith.constant 1.000000e+00 : f32
    %15 = vector.broadcast %cst_13 : f32 to vector<4x256xf32>
    %16 = arith.addf %15, %14 : vector<4x256xf32>
    %17 = arith.divf %15, %16 : vector<4x256xf32>
    %18 = math.tanh %12 : vector<4x256xf32>
    %19 = vector.extract_strided_slice %17 {offsets = [0, 0], sizes = [4, 64], strides = [1, 1]} : vector<4x256xf32> to vector<4x64xf32>
    %20 = vector.extract_strided_slice %17 {offsets = [0, 64], sizes = [4, 64], strides = [1, 1]} : vector<4x256xf32> to vector<4x64xf32>
    %21 = vector.extract_strided_slice %18 {offsets = [0, 128], sizes = [4, 64], strides = [1, 1]} : vector<4x256xf32> to vector<4x64xf32>
    %22 = vector.extract_strided_slice %17 {offsets = [0, 192], sizes = [4, 64], strides = [1, 1]} : vector<4x256xf32> to vector<4x64xf32>
    %23 = arith.mulf %20, %9 : vector<4x64xf32>
    %24 = arith.mulf %19, %21 : vector<4x64xf32>
    %25 = arith.addf %23, %24 : vector<4x64xf32>
    %26 = math.tanh %25 : vector<4x64xf32>
    %27 = arith.mulf %22, %26 : vector<4x64xf32>
    %28 = tpu.concatenate %27, %9 in 1 : vector<4x64xf32>, vector<4x64xf32> -> vector<4x128xf32>
    %cst_14 = arith.constant dense<0.000000e+00> : vector<4x256xf32>
    %29 = tpu.matmul %28, %1, %cst_14 {dimension_numbers = #tpu.dot_dimension_numbers<[1], [0], [0], [1], [0, 0, 1, 1], [], []>} : vector<4x128xf32>, vector<128x256xf32>, vector<4x256xf32> -> vector<4x256xf32>
    %30 = vector.broadcast %2 : vector<1x256xf32> to vector<4x256xf32>
    %31 = arith.addf %29, %30 : vector<4x256xf32>
    %32 = arith.negf %31 : vector<4x256xf32>
    %33 = math.exp %32 : vector<4x256xf32>
    %cst_15 = arith.constant 1.000000e+00 : f32
    %34 = vector.broadcast %cst_15 : f32 to vector<4x256xf32>
    %35 = arith.addf %34, %33 : vector<4x256xf32>
    %36 = arith.divf %34, %35 : vector<4x256xf32>
    %37 = math.tanh %31 : vector<4x256xf32>
    %38 = vector.extract_strided_slice %36 {offsets = [0, 0], sizes = [4, 64], strides = [1, 1]} : vector<4x256xf32> to vector<4x64xf32>
    %39 = vector.extract_strided_slice %36 {offsets = [0, 64], sizes = [4, 64], strides = [1, 1]} : vector<4x256xf32> to vector<4x64xf32>
    %40 = vector.extract_strided_slice %37 {offsets = [0, 128], sizes = [4, 64], strides = [1, 1]} : vector<4x256xf32> to vector<4x64xf32>
    %41 = vector.extract_strided_slice %36 {offsets = [0, 192], sizes = [4, 64], strides = [1, 1]} : vector<4x256xf32> to vector<4x64xf32>
    %42 = arith.mulf %39, %9 : vector<4x64xf32>
    %43 = arith.mulf %38, %40 : vector<4x64xf32>
    %44 = arith.addf %42, %43 : vector<4x64xf32>
    %45 = math.tanh %44 : vector<4x64xf32>
    %46 = arith.mulf %41, %45 : vector<4x64xf32>
    %47 = vector.extract_strided_slice %8 {offsets = [4, 0], sizes = [4, 256], strides = [1, 1]} : vector<32x256xf32> to vector<4x256xf32>
    %cst_16 = arith.constant dense<0.000000e+00> : vector<4x256xf32>
    %48 = tpu.matmul %27, %0, %cst_16 {dimension_numbers = #tpu.dot_dimension_numbers<[1], [0], [0], [1], [0, 0, 1, 1], [], []>} : vector<4x64xf32>, vector<64x256xf32>, vector<4x256xf32> -> vector<4x256xf32>
    %49 = arith.addf %47, %48 : vector<4x256xf32>
    %50 = arith.negf %49 : vector<4x256xf32>
    %51 = math.exp %50 : vector<4x256xf32>
    %cst_17 = arith.constant 1.000000e+00 : f32
    %52 = vector.broadcast %cst_17 : f32 to vector<4x256xf32>
    %53 = arith.addf %52, %51 : vector<4x256xf32>
    %54 = arith.divf %52, %53 : vector<4x256xf32>
    %55 = math.tanh %49 : vector<4x256xf32>
    %56 = vector.extract_strided_slice %54 {offsets = [0, 0], sizes = [4, 64], strides = [1, 1]} : vector<4x256xf32> to vector<4x64xf32>
    %57 = vector.extract_strided_slice %54 {offsets = [0, 64], sizes = [4, 64], strides = [1, 1]} : vector<4x256xf32> to vector<4x64xf32>
    %58 = vector.extract_strided_slice %55 {offsets = [0, 128], sizes = [4, 64], strides = [1, 1]} : vector<4x256xf32> to vector<4x64xf32>
    %59 = vector.extract_strided_slice %54 {offsets = [0, 192], sizes = [4, 64], strides = [1, 1]} : vector<4x256xf32> to vector<4x64xf32>
    %60 = arith.mulf %57, %25 : vector<4x64xf32>
    %61 = arith.mulf %56, %58 : vector<4x64xf32>
    %62 = arith.addf %60, %61 : vector<4x64xf32>
    %63 = math.tanh %62 : vector<4x64xf32>
    %64 = arith.mulf %59, %63 : vector<4x64xf32>
    %65 = tpu.concatenate %64, %46 in 1 : vector<4x64xf32>, vector<4x64xf32> -> vector<4x128xf32>
    %cst_18 = arith.constant dense<0.000000e+00> : vector<4x256xf32>
    %66 = tpu.matmul %65, %1, %cst_18 {dimension_numbers = #tpu.dot_dimension_numbers<[1], [0], [0], [1], [0, 0, 1, 1], [], []>} : vector<4x128xf32>, vector<128x256xf32>, vector<4x256xf32> -> vector<4x256xf32>
    %67 = vector.broadcast %2 : vector<1x256xf32> to vector<4x256xf32>
    %68 = arith.addf %66, %67 : vector<4x256xf32>
    %69 = arith.negf %68 : vector<4x256xf32>
    %70 = math.exp %69 : vector<4x256xf32>
    %cst_19 = arith.constant 1.000000e+00 : f32
    %71 = vector.broadcast %cst_19 : f32 to vector<4x256xf32>
    %72 = arith.addf %71, %70 : vector<4x256xf32>
    %73 = arith.divf %71, %72 : vector<4x256xf32>
    %74 = math.tanh %68 : vector<4x256xf32>
    %75 = vector.extract_strided_slice %73 {offsets = [0, 0], sizes = [4, 64], strides = [1, 1]} : vector<4x256xf32> to vector<4x64xf32>
    %76 = vector.extract_strided_slice %73 {offsets = [0, 64], sizes = [4, 64], strides = [1, 1]} : vector<4x256xf32> to vector<4x64xf32>
    %77 = vector.extract_strided_slice %74 {offsets = [0, 128], sizes = [4, 64], strides = [1, 1]} : vector<4x256xf32> to vector<4x64xf32>
    %78 = vector.extract_strided_slice %73 {offsets = [0, 192], sizes = [4, 64], strides = [1, 1]} : vector<4x256xf32> to vector<4x64xf32>
    %79 = arith.mulf %76, %44 : vector<4x64xf32>
    %80 = arith.mulf %75, %77 : vector<4x64xf32>
    %81 = arith.addf %79, %80 : vector<4x64xf32>
    %82 = math.tanh %81 : vector<4x64xf32>
    %83 = arith.mulf %78, %82 : vector<4x64xf32>
    %84 = vector.extract_strided_slice %8 {offsets = [8, 0], sizes = [4, 256], strides = [1, 1]} : vector<32x256xf32> to vector<4x256xf32>
    %cst_20 = arith.constant dense<0.000000e+00> : vector<4x256xf32>
    %85 = tpu.matmul %64, %0, %cst_20 {dimension_numbers = #tpu.dot_dimension_numbers<[1], [0], [0], [1], [0, 0, 1, 1], [], []>} : vector<4x64xf32>, vector<64x256xf32>, vector<4x256xf32> -> vector<4x256xf32>
    %86 = arith.addf %84, %85 : vector<4x256xf32>
    %87 = arith.negf %86 : vector<4x256xf32>
    %88 = math.exp %87 : vector<4x256xf32>
    %cst_21 = arith.constant 1.000000e+00 : f32
    %89 = vector.broadcast %cst_21 : f32 to vector<4x256xf32>
    %90 = arith.addf %89, %88 : vector<4x256xf32>
    %91 = arith.divf %89, %90 : vector<4x256xf32>
    %92 = math.tanh %86 : vector<4x256xf32>
    %93 = vector.extract_strided_slice %91 {offsets = [0, 0], sizes = [4, 64], strides = [1, 1]} : vector<4x256xf32> to vector<4x64xf32>
    %94 = vector.extract_strided_slice %91 {offsets = [0, 64], sizes = [4, 64], strides = [1, 1]} : vector<4x256xf32> to vector<4x64xf32>
    %95 = vector.extract_strided_slice %92 {offsets = [0, 128], sizes = [4, 64], strides = [1, 1]} : vector<4x256xf32> to vector<4x64xf32>
    %96 = vector.extract_strided_slice %91 {offsets = [0, 192], sizes = [4, 64], strides = [1, 1]} : vector<4x256xf32> to vector<4x64xf32>
    %97 = arith.mulf %94, %62 : vector<4x64xf32>
    %98 = arith.mulf %93, %95 : vector<4x64xf32>
    %99 = arith.addf %97, %98 : vector<4x64xf32>
    %100 = math.tanh %99 : vector<4x64xf32>
    %101 = arith.mulf %96, %100 : vector<4x64xf32>
    %102 = tpu.concatenate %101, %83 in 1 : vector<4x64xf32>, vector<4x64xf32> -> vector<4x128xf32>
    %cst_22 = arith.constant dense<0.000000e+00> : vector<4x256xf32>
    %103 = tpu.matmul %102, %1, %cst_22 {dimension_numbers = #tpu.dot_dimension_numbers<[1], [0], [0], [1], [0, 0, 1, 1], [], []>} : vector<4x128xf32>, vector<128x256xf32>, vector<4x256xf32> -> vector<4x256xf32>
    %104 = vector.broadcast %2 : vector<1x256xf32> to vector<4x256xf32>
    %105 = arith.addf %103, %104 : vector<4x256xf32>
    %106 = arith.negf %105 : vector<4x256xf32>
    %107 = math.exp %106 : vector<4x256xf32>
    %cst_23 = arith.constant 1.000000e+00 : f32
    %108 = vector.broadcast %cst_23 : f32 to vector<4x256xf32>
    %109 = arith.addf %108, %107 : vector<4x256xf32>
    %110 = arith.divf %108, %109 : vector<4x256xf32>
    %111 = math.tanh %105 : vector<4x256xf32>
    %112 = vector.extract_strided_slice %110 {offsets = [0, 0], sizes = [4, 64], strides = [1, 1]} : vector<4x256xf32> to vector<4x64xf32>
    %113 = vector.extract_strided_slice %110 {offsets = [0, 64], sizes = [4, 64], strides = [1, 1]} : vector<4x256xf32> to vector<4x64xf32>
    %114 = vector.extract_strided_slice %111 {offsets = [0, 128], sizes = [4, 64], strides = [1, 1]} : vector<4x256xf32> to vector<4x64xf32>
    %115 = vector.extract_strided_slice %110 {offsets = [0, 192], sizes = [4, 64], strides = [1, 1]} : vector<4x256xf32> to vector<4x64xf32>
    %116 = arith.mulf %113, %81 : vector<4x64xf32>
    %117 = arith.mulf %112, %114 : vector<4x64xf32>
    %118 = arith.addf %116, %117 : vector<4x64xf32>
    %119 = math.tanh %118 : vector<4x64xf32>
    %120 = arith.mulf %115, %119 : vector<4x64xf32>
    %121 = vector.extract_strided_slice %8 {offsets = [12, 0], sizes = [4, 256], strides = [1, 1]} : vector<32x256xf32> to vector<4x256xf32>
    %cst_24 = arith.constant dense<0.000000e+00> : vector<4x256xf32>
    %122 = tpu.matmul %101, %0, %cst_24 {dimension_numbers = #tpu.dot_dimension_numbers<[1], [0], [0], [1], [0, 0, 1, 1], [], []>} : vector<4x64xf32>, vector<64x256xf32>, vector<4x256xf32> -> vector<4x256xf32>
    %123 = arith.addf %121, %122 : vector<4x256xf32>
    %124 = arith.negf %123 : vector<4x256xf32>
    %125 = math.exp %124 : vector<4x256xf32>
    %cst_25 = arith.constant 1.000000e+00 : f32
    %126 = vector.broadcast %cst_25 : f32 to vector<4x256xf32>
    %127 = arith.addf %126, %125 : vector<4x256xf32>
    %128 = arith.divf %126, %127 : vector<4x256xf32>
    %129 = math.tanh %123 : vector<4x256xf32>
    %130 = vector.extract_strided_slice %128 {offsets = [0, 0], sizes = [4, 64], strides = [1, 1]} : vector<4x256xf32> to vector<4x64xf32>
    %131 = vector.extract_strided_slice %128 {offsets = [0, 64], sizes = [4, 64], strides = [1, 1]} : vector<4x256xf32> to vector<4x64xf32>
    %132 = vector.extract_strided_slice %129 {offsets = [0, 128], sizes = [4, 64], strides = [1, 1]} : vector<4x256xf32> to vector<4x64xf32>
    %133 = vector.extract_strided_slice %128 {offsets = [0, 192], sizes = [4, 64], strides = [1, 1]} : vector<4x256xf32> to vector<4x64xf32>
    %134 = arith.mulf %131, %99 : vector<4x64xf32>
    %135 = arith.mulf %130, %132 : vector<4x64xf32>
    %136 = arith.addf %134, %135 : vector<4x64xf32>
    %137 = math.tanh %136 : vector<4x64xf32>
    %138 = arith.mulf %133, %137 : vector<4x64xf32>
    %139 = tpu.concatenate %138, %120 in 1 : vector<4x64xf32>, vector<4x64xf32> -> vector<4x128xf32>
    %cst_26 = arith.constant dense<0.000000e+00> : vector<4x256xf32>
    %140 = tpu.matmul %139, %1, %cst_26 {dimension_numbers = #tpu.dot_dimension_numbers<[1], [0], [0], [1], [0, 0, 1, 1], [], []>} : vector<4x128xf32>, vector<128x256xf32>, vector<4x256xf32> -> vector<4x256xf32>
    %141 = vector.broadcast %2 : vector<1x256xf32> to vector<4x256xf32>
    %142 = arith.addf %140, %141 : vector<4x256xf32>
    %143 = arith.negf %142 : vector<4x256xf32>
    %144 = math.exp %143 : vector<4x256xf32>
    %cst_27 = arith.constant 1.000000e+00 : f32
    %145 = vector.broadcast %cst_27 : f32 to vector<4x256xf32>
    %146 = arith.addf %145, %144 : vector<4x256xf32>
    %147 = arith.divf %145, %146 : vector<4x256xf32>
    %148 = math.tanh %142 : vector<4x256xf32>
    %149 = vector.extract_strided_slice %147 {offsets = [0, 0], sizes = [4, 64], strides = [1, 1]} : vector<4x256xf32> to vector<4x64xf32>
    %150 = vector.extract_strided_slice %147 {offsets = [0, 64], sizes = [4, 64], strides = [1, 1]} : vector<4x256xf32> to vector<4x64xf32>
    %151 = vector.extract_strided_slice %148 {offsets = [0, 128], sizes = [4, 64], strides = [1, 1]} : vector<4x256xf32> to vector<4x64xf32>
    %152 = vector.extract_strided_slice %147 {offsets = [0, 192], sizes = [4, 64], strides = [1, 1]} : vector<4x256xf32> to vector<4x64xf32>
    %153 = arith.mulf %150, %118 : vector<4x64xf32>
    %154 = arith.mulf %149, %151 : vector<4x64xf32>
    %155 = arith.addf %153, %154 : vector<4x64xf32>
    %156 = math.tanh %155 : vector<4x64xf32>
    %157 = arith.mulf %152, %156 : vector<4x64xf32>
    %158 = vector.extract_strided_slice %8 {offsets = [16, 0], sizes = [4, 256], strides = [1, 1]} : vector<32x256xf32> to vector<4x256xf32>
    %cst_28 = arith.constant dense<0.000000e+00> : vector<4x256xf32>
    %159 = tpu.matmul %138, %0, %cst_28 {dimension_numbers = #tpu.dot_dimension_numbers<[1], [0], [0], [1], [0, 0, 1, 1], [], []>} : vector<4x64xf32>, vector<64x256xf32>, vector<4x256xf32> -> vector<4x256xf32>
    %160 = arith.addf %158, %159 : vector<4x256xf32>
    %161 = arith.negf %160 : vector<4x256xf32>
    %162 = math.exp %161 : vector<4x256xf32>
    %cst_29 = arith.constant 1.000000e+00 : f32
    %163 = vector.broadcast %cst_29 : f32 to vector<4x256xf32>
    %164 = arith.addf %163, %162 : vector<4x256xf32>
    %165 = arith.divf %163, %164 : vector<4x256xf32>
    %166 = math.tanh %160 : vector<4x256xf32>
    %167 = vector.extract_strided_slice %165 {offsets = [0, 0], sizes = [4, 64], strides = [1, 1]} : vector<4x256xf32> to vector<4x64xf32>
    %168 = vector.extract_strided_slice %165 {offsets = [0, 64], sizes = [4, 64], strides = [1, 1]} : vector<4x256xf32> to vector<4x64xf32>
    %169 = vector.extract_strided_slice %166 {offsets = [0, 128], sizes = [4, 64], strides = [1, 1]} : vector<4x256xf32> to vector<4x64xf32>
    %170 = vector.extract_strided_slice %165 {offsets = [0, 192], sizes = [4, 64], strides = [1, 1]} : vector<4x256xf32> to vector<4x64xf32>
    %171 = arith.mulf %168, %136 : vector<4x64xf32>
    %172 = arith.mulf %167, %169 : vector<4x64xf32>
    %173 = arith.addf %171, %172 : vector<4x64xf32>
    %174 = math.tanh %173 : vector<4x64xf32>
    %175 = arith.mulf %170, %174 : vector<4x64xf32>
    %176 = tpu.concatenate %175, %157 in 1 : vector<4x64xf32>, vector<4x64xf32> -> vector<4x128xf32>
    %cst_30 = arith.constant dense<0.000000e+00> : vector<4x256xf32>
    %177 = tpu.matmul %176, %1, %cst_30 {dimension_numbers = #tpu.dot_dimension_numbers<[1], [0], [0], [1], [0, 0, 1, 1], [], []>} : vector<4x128xf32>, vector<128x256xf32>, vector<4x256xf32> -> vector<4x256xf32>
    %178 = vector.broadcast %2 : vector<1x256xf32> to vector<4x256xf32>
    %179 = arith.addf %177, %178 : vector<4x256xf32>
    %180 = arith.negf %179 : vector<4x256xf32>
    %181 = math.exp %180 : vector<4x256xf32>
    %cst_31 = arith.constant 1.000000e+00 : f32
    %182 = vector.broadcast %cst_31 : f32 to vector<4x256xf32>
    %183 = arith.addf %182, %181 : vector<4x256xf32>
    %184 = arith.divf %182, %183 : vector<4x256xf32>
    %185 = math.tanh %179 : vector<4x256xf32>
    %186 = vector.extract_strided_slice %184 {offsets = [0, 0], sizes = [4, 64], strides = [1, 1]} : vector<4x256xf32> to vector<4x64xf32>
    %187 = vector.extract_strided_slice %184 {offsets = [0, 64], sizes = [4, 64], strides = [1, 1]} : vector<4x256xf32> to vector<4x64xf32>
    %188 = vector.extract_strided_slice %185 {offsets = [0, 128], sizes = [4, 64], strides = [1, 1]} : vector<4x256xf32> to vector<4x64xf32>
    %189 = vector.extract_strided_slice %184 {offsets = [0, 192], sizes = [4, 64], strides = [1, 1]} : vector<4x256xf32> to vector<4x64xf32>
    %190 = arith.mulf %187, %155 : vector<4x64xf32>
    %191 = arith.mulf %186, %188 : vector<4x64xf32>
    %192 = arith.addf %190, %191 : vector<4x64xf32>
    %193 = math.tanh %192 : vector<4x64xf32>
    %194 = arith.mulf %189, %193 : vector<4x64xf32>
    %195 = vector.extract_strided_slice %8 {offsets = [20, 0], sizes = [4, 256], strides = [1, 1]} : vector<32x256xf32> to vector<4x256xf32>
    %cst_32 = arith.constant dense<0.000000e+00> : vector<4x256xf32>
    %196 = tpu.matmul %175, %0, %cst_32 {dimension_numbers = #tpu.dot_dimension_numbers<[1], [0], [0], [1], [0, 0, 1, 1], [], []>} : vector<4x64xf32>, vector<64x256xf32>, vector<4x256xf32> -> vector<4x256xf32>
    %197 = arith.addf %195, %196 : vector<4x256xf32>
    %198 = arith.negf %197 : vector<4x256xf32>
    %199 = math.exp %198 : vector<4x256xf32>
    %cst_33 = arith.constant 1.000000e+00 : f32
    %200 = vector.broadcast %cst_33 : f32 to vector<4x256xf32>
    %201 = arith.addf %200, %199 : vector<4x256xf32>
    %202 = arith.divf %200, %201 : vector<4x256xf32>
    %203 = math.tanh %197 : vector<4x256xf32>
    %204 = vector.extract_strided_slice %202 {offsets = [0, 0], sizes = [4, 64], strides = [1, 1]} : vector<4x256xf32> to vector<4x64xf32>
    %205 = vector.extract_strided_slice %202 {offsets = [0, 64], sizes = [4, 64], strides = [1, 1]} : vector<4x256xf32> to vector<4x64xf32>
    %206 = vector.extract_strided_slice %203 {offsets = [0, 128], sizes = [4, 64], strides = [1, 1]} : vector<4x256xf32> to vector<4x64xf32>
    %207 = vector.extract_strided_slice %202 {offsets = [0, 192], sizes = [4, 64], strides = [1, 1]} : vector<4x256xf32> to vector<4x64xf32>
    %208 = arith.mulf %205, %173 : vector<4x64xf32>
    %209 = arith.mulf %204, %206 : vector<4x64xf32>
    %210 = arith.addf %208, %209 : vector<4x64xf32>
    %211 = math.tanh %210 : vector<4x64xf32>
    %212 = arith.mulf %207, %211 : vector<4x64xf32>
    %213 = tpu.concatenate %212, %194 in 1 : vector<4x64xf32>, vector<4x64xf32> -> vector<4x128xf32>
    %cst_34 = arith.constant dense<0.000000e+00> : vector<4x256xf32>
    %214 = tpu.matmul %213, %1, %cst_34 {dimension_numbers = #tpu.dot_dimension_numbers<[1], [0], [0], [1], [0, 0, 1, 1], [], []>} : vector<4x128xf32>, vector<128x256xf32>, vector<4x256xf32> -> vector<4x256xf32>
    %215 = vector.broadcast %2 : vector<1x256xf32> to vector<4x256xf32>
    %216 = arith.addf %214, %215 : vector<4x256xf32>
    %217 = arith.negf %216 : vector<4x256xf32>
    %218 = math.exp %217 : vector<4x256xf32>
    %cst_35 = arith.constant 1.000000e+00 : f32
    %219 = vector.broadcast %cst_35 : f32 to vector<4x256xf32>
    %220 = arith.addf %219, %218 : vector<4x256xf32>
    %221 = arith.divf %219, %220 : vector<4x256xf32>
    %222 = math.tanh %216 : vector<4x256xf32>
    %223 = vector.extract_strided_slice %221 {offsets = [0, 0], sizes = [4, 64], strides = [1, 1]} : vector<4x256xf32> to vector<4x64xf32>
    %224 = vector.extract_strided_slice %221 {offsets = [0, 64], sizes = [4, 64], strides = [1, 1]} : vector<4x256xf32> to vector<4x64xf32>
    %225 = vector.extract_strided_slice %222 {offsets = [0, 128], sizes = [4, 64], strides = [1, 1]} : vector<4x256xf32> to vector<4x64xf32>
    %226 = vector.extract_strided_slice %221 {offsets = [0, 192], sizes = [4, 64], strides = [1, 1]} : vector<4x256xf32> to vector<4x64xf32>
    %227 = arith.mulf %224, %192 : vector<4x64xf32>
    %228 = arith.mulf %223, %225 : vector<4x64xf32>
    %229 = arith.addf %227, %228 : vector<4x64xf32>
    %230 = math.tanh %229 : vector<4x64xf32>
    %231 = arith.mulf %226, %230 : vector<4x64xf32>
    %232 = vector.extract_strided_slice %8 {offsets = [24, 0], sizes = [4, 256], strides = [1, 1]} : vector<32x256xf32> to vector<4x256xf32>
    %cst_36 = arith.constant dense<0.000000e+00> : vector<4x256xf32>
    %233 = tpu.matmul %212, %0, %cst_36 {dimension_numbers = #tpu.dot_dimension_numbers<[1], [0], [0], [1], [0, 0, 1, 1], [], []>} : vector<4x64xf32>, vector<64x256xf32>, vector<4x256xf32> -> vector<4x256xf32>
    %234 = arith.addf %232, %233 : vector<4x256xf32>
    %235 = arith.negf %234 : vector<4x256xf32>
    %236 = math.exp %235 : vector<4x256xf32>
    %cst_37 = arith.constant 1.000000e+00 : f32
    %237 = vector.broadcast %cst_37 : f32 to vector<4x256xf32>
    %238 = arith.addf %237, %236 : vector<4x256xf32>
    %239 = arith.divf %237, %238 : vector<4x256xf32>
    %240 = math.tanh %234 : vector<4x256xf32>
    %241 = vector.extract_strided_slice %239 {offsets = [0, 0], sizes = [4, 64], strides = [1, 1]} : vector<4x256xf32> to vector<4x64xf32>
    %242 = vector.extract_strided_slice %239 {offsets = [0, 64], sizes = [4, 64], strides = [1, 1]} : vector<4x256xf32> to vector<4x64xf32>
    %243 = vector.extract_strided_slice %240 {offsets = [0, 128], sizes = [4, 64], strides = [1, 1]} : vector<4x256xf32> to vector<4x64xf32>
    %244 = vector.extract_strided_slice %239 {offsets = [0, 192], sizes = [4, 64], strides = [1, 1]} : vector<4x256xf32> to vector<4x64xf32>
    %245 = arith.mulf %242, %210 : vector<4x64xf32>
    %246 = arith.mulf %241, %243 : vector<4x64xf32>
    %247 = arith.addf %245, %246 : vector<4x64xf32>
    %248 = math.tanh %247 : vector<4x64xf32>
    %249 = arith.mulf %244, %248 : vector<4x64xf32>
    %250 = tpu.concatenate %249, %231 in 1 : vector<4x64xf32>, vector<4x64xf32> -> vector<4x128xf32>
    %cst_38 = arith.constant dense<0.000000e+00> : vector<4x256xf32>
    %251 = tpu.matmul %250, %1, %cst_38 {dimension_numbers = #tpu.dot_dimension_numbers<[1], [0], [0], [1], [0, 0, 1, 1], [], []>} : vector<4x128xf32>, vector<128x256xf32>, vector<4x256xf32> -> vector<4x256xf32>
    %252 = vector.broadcast %2 : vector<1x256xf32> to vector<4x256xf32>
    %253 = arith.addf %251, %252 : vector<4x256xf32>
    %254 = arith.negf %253 : vector<4x256xf32>
    %255 = math.exp %254 : vector<4x256xf32>
    %cst_39 = arith.constant 1.000000e+00 : f32
    %256 = vector.broadcast %cst_39 : f32 to vector<4x256xf32>
    %257 = arith.addf %256, %255 : vector<4x256xf32>
    %258 = arith.divf %256, %257 : vector<4x256xf32>
    %259 = math.tanh %253 : vector<4x256xf32>
    %260 = vector.extract_strided_slice %258 {offsets = [0, 0], sizes = [4, 64], strides = [1, 1]} : vector<4x256xf32> to vector<4x64xf32>
    %261 = vector.extract_strided_slice %258 {offsets = [0, 64], sizes = [4, 64], strides = [1, 1]} : vector<4x256xf32> to vector<4x64xf32>
    %262 = vector.extract_strided_slice %259 {offsets = [0, 128], sizes = [4, 64], strides = [1, 1]} : vector<4x256xf32> to vector<4x64xf32>
    %263 = vector.extract_strided_slice %258 {offsets = [0, 192], sizes = [4, 64], strides = [1, 1]} : vector<4x256xf32> to vector<4x64xf32>
    %264 = arith.mulf %261, %229 : vector<4x64xf32>
    %265 = arith.mulf %260, %262 : vector<4x64xf32>
    %266 = arith.addf %264, %265 : vector<4x64xf32>
    %267 = math.tanh %266 : vector<4x64xf32>
    %268 = arith.mulf %263, %267 : vector<4x64xf32>
    %269 = vector.extract_strided_slice %8 {offsets = [28, 0], sizes = [4, 256], strides = [1, 1]} : vector<32x256xf32> to vector<4x256xf32>
    %cst_40 = arith.constant dense<0.000000e+00> : vector<4x256xf32>
    %270 = tpu.matmul %249, %0, %cst_40 {dimension_numbers = #tpu.dot_dimension_numbers<[1], [0], [0], [1], [0, 0, 1, 1], [], []>} : vector<4x64xf32>, vector<64x256xf32>, vector<4x256xf32> -> vector<4x256xf32>
    %271 = arith.addf %269, %270 : vector<4x256xf32>
    %272 = arith.negf %271 : vector<4x256xf32>
    %273 = math.exp %272 : vector<4x256xf32>
    %cst_41 = arith.constant 1.000000e+00 : f32
    %274 = vector.broadcast %cst_41 : f32 to vector<4x256xf32>
    %275 = arith.addf %274, %273 : vector<4x256xf32>
    %276 = arith.divf %274, %275 : vector<4x256xf32>
    %277 = math.tanh %271 : vector<4x256xf32>
    %278 = vector.extract_strided_slice %276 {offsets = [0, 0], sizes = [4, 64], strides = [1, 1]} : vector<4x256xf32> to vector<4x64xf32>
    %279 = vector.extract_strided_slice %276 {offsets = [0, 64], sizes = [4, 64], strides = [1, 1]} : vector<4x256xf32> to vector<4x64xf32>
    %280 = vector.extract_strided_slice %277 {offsets = [0, 128], sizes = [4, 64], strides = [1, 1]} : vector<4x256xf32> to vector<4x64xf32>
    %281 = vector.extract_strided_slice %276 {offsets = [0, 192], sizes = [4, 64], strides = [1, 1]} : vector<4x256xf32> to vector<4x64xf32>
    %282 = arith.mulf %279, %247 : vector<4x64xf32>
    %283 = arith.mulf %278, %280 : vector<4x64xf32>
    %284 = arith.addf %282, %283 : vector<4x64xf32>
    %285 = math.tanh %284 : vector<4x64xf32>
    %286 = arith.mulf %281, %285 : vector<4x64xf32>
    %287 = tpu.concatenate %286, %268 in 1 : vector<4x64xf32>, vector<4x64xf32> -> vector<4x128xf32>
    %cst_42 = arith.constant dense<0.000000e+00> : vector<4x256xf32>
    %288 = tpu.matmul %287, %1, %cst_42 {dimension_numbers = #tpu.dot_dimension_numbers<[1], [0], [0], [1], [0, 0, 1, 1], [], []>} : vector<4x128xf32>, vector<128x256xf32>, vector<4x256xf32> -> vector<4x256xf32>
    %289 = vector.broadcast %2 : vector<1x256xf32> to vector<4x256xf32>
    %290 = arith.addf %288, %289 : vector<4x256xf32>
    %291 = arith.negf %290 : vector<4x256xf32>
    %292 = math.exp %291 : vector<4x256xf32>
    %cst_43 = arith.constant 1.000000e+00 : f32
    %293 = vector.broadcast %cst_43 : f32 to vector<4x256xf32>
    %294 = arith.addf %293, %292 : vector<4x256xf32>
    %295 = arith.divf %293, %294 : vector<4x256xf32>
    %296 = math.tanh %290 : vector<4x256xf32>
    %297 = vector.extract_strided_slice %295 {offsets = [0, 0], sizes = [4, 64], strides = [1, 1]} : vector<4x256xf32> to vector<4x64xf32>
    %298 = vector.extract_strided_slice %295 {offsets = [0, 64], sizes = [4, 64], strides = [1, 1]} : vector<4x256xf32> to vector<4x64xf32>
    %299 = vector.extract_strided_slice %296 {offsets = [0, 128], sizes = [4, 64], strides = [1, 1]} : vector<4x256xf32> to vector<4x64xf32>
    %300 = vector.extract_strided_slice %295 {offsets = [0, 192], sizes = [4, 64], strides = [1, 1]} : vector<4x256xf32> to vector<4x64xf32>
    %301 = arith.mulf %298, %266 : vector<4x64xf32>
    %302 = arith.mulf %297, %299 : vector<4x64xf32>
    %303 = arith.addf %301, %302 : vector<4x64xf32>
    %304 = math.tanh %303 : vector<4x64xf32>
    %305 = arith.mulf %300, %304 : vector<4x64xf32>
    %c0_44 = arith.constant 0 : index
    %c0_45 = arith.constant 0 : index
    %306 = vector.load %arg6[%c0_44, %c0_45] : memref<64x128xf32, #tpu.memory_space<vmem>>, vector<64x128xf32>
    %cst_46 = arith.constant dense<0.000000e+00> : vector<4x128xf32>
    %307 = tpu.matmul %305, %306, %cst_46 {dimension_numbers = #tpu.dot_dimension_numbers<[1], [0], [0], [1], [0, 0, 1, 1], [], []>} : vector<4x64xf32>, vector<64x128xf32>, vector<4x128xf32> -> vector<4x128xf32>
    %c0_47 = arith.constant 0 : index
    %c0_48 = arith.constant 0 : index
    %308 = vector.load %arg7[%c0_47, %c0_48] : memref<1x128xf32, #tpu.memory_space<vmem>>, vector<1x128xf32>
    %309 = vector.broadcast %308 : vector<1x128xf32> to vector<4x128xf32>
    %310 = arith.addf %307, %309 : vector<4x128xf32>
    %c0_49 = arith.constant 0 : index
    %c0_50 = arith.constant 0 : index
    %311 = vector.load %arg8[%c0_49, %c0_50] : memref<4x128xf32, #tpu.memory_space<vmem>>, vector<4x128xf32>
    tpu.vector_store %arg8[%c0_49, %c0_50], %310 {strides = array<i32>} : memref<4x128xf32, #tpu.memory_space<vmem>>, vector<4x128xf32>,
    return
  }
}

</mosaic_0001>

<llo_original>
// kernel: tpu_custom_call.1
$region0: #{tpu_custom_call.1}
  #allocation0 [shape = 'u32[]', space=smem, size = 0x4, offset = 0x4, fixed_abs, tag = 'smem constant byte address 0x4 - core index']
  #allocation1 [shape = 'u32[72,128]{1,0:T(1,128)}', space=vmem, size = 0x9000, scoped, tag = 'internal scratch']
  %s0 = inlined_call_operand.vmem [shape: f32[32,6], index: 0, kind: input, shape index: {}]
  %s1 = inlined_call_operand.vmem [shape: f32[6,256], index: 1, kind: input, shape index: {}]
  %s2 = inlined_call_operand.hbm [shape: f32[64,256], index: 2, kind: input, shape index: {}]
  %s3 = inlined_call_operand.vmem [shape: f32[1,256], index: 3, kind: input, shape index: {}]
  %s4 = inlined_call_operand.hbm [shape: f32[128,256], index: 4, kind: input, shape index: {}]
  %s5 = inlined_call_operand.vmem [shape: f32[1,256], index: 5, kind: input, shape index: {}]
  %s6 = inlined_call_operand.hbm [shape: f32[64,128], index: 6, kind: input, shape index: {}]
  %s7 = inlined_call_operand.vmem [shape: f32[1,128], index: 7, kind: input, shape index: {}]
  %s8 = inlined_call_operand.hbm [shape: f32[4,128], index: 8, kind: output, shape index: {}]
  %s9 = sld [smem:[#allocation0]]
  $region54: #{tpu_custom_call.1} parent=0
    _
  %s11 = ssub.s32 1, %s9
  %s12 = scalar_select 0, %s11, %s9
  $region1: #{tpu_custom_call.1} parent=0
    #allocation2 [shape = 'u8[65536]{0}', space=vmem, size = 0x10000, scoped, tag = 'input window, operand 2, single buffered']
    #allocation3 [shape = 's32[1]{0}', space=sflag, size = 0x4, scoped, tag = 'scoped memory for tpu_custom_call.1']
    #allocation4 [shape = 's32[1]{0}', space=sflag, size = 0x4, scoped, tag = 'scoped memory for tpu_custom_call.1']
    #allocation5 [shape = 'u8[131072]{0}', space=vmem, size = 0x20000, scoped, tag = 'input window, operand 4, single buffered']
    #allocation6 [shape = 's32[1]{0}', space=sflag, size = 0x4, scoped, tag = 'scoped memory for tpu_custom_call.1']
    #allocation7 [shape = 'u8[32768]{0}', space=vmem, size = 0x8000, scoped, tag = 'input window, operand 6, single buffered']
    #allocation8 [shape = 'u8[2048]{0}', space=vmem, size = 0x800, scoped, tag = 'output window, operand 0, single buffered']
    %13 = vsyncpa [#allocation3], 0
    %14 = vsyncpa [#allocation6], 0
    %15 = vsyncpa [#allocation4], 0
    // Predicated region
    $region2: #{tpu_custom_call.1} parent=1 // pred_check
      _
    $region3: #{tpu_custom_call.1} parent=1 // pred_check_branch
      %17 = sbr.rel (0) target = $region5
    $region4: #{tpu_custom_call.1} parent=1 // pred_region
      _
    $region5: #{tpu_custom_call.1} parent=1 // pred_fallthru
      _
    // Predicated region
    $region6: #{tpu_custom_call.1} parent=1 // pred_check
      _
    $region7: #{tpu_custom_call.1} parent=1 // pred_check_branch
      %19 = sbr.rel (0) target = $region9
    $region8: #{tpu_custom_call.1} parent=1 // pred_region
      _
    $region9: #{tpu_custom_call.1} parent=1 // pred_fallthru
      _
    // Predicated region
    $region10: #{tpu_custom_call.1} parent=1 // pred_check
      _
    $region11: #{tpu_custom_call.1} parent=1 // pred_check_branch
      %21 = sbr.rel (0) target = $region13
    $region12: #{tpu_custom_call.1} parent=1 // pred_region
      %23 = vsyncadd [#allocation3], 0
      %s24 = sshll.u32 %s2, 4
      %s25 = int_to_ptr.hbm [resolvable:$true] %s24
      %s26 = sshll.u32 [#allocation2], 4
      %s27 = int_to_ptr.vmem [resolvable:$true] %s26
      %32 = dma.hbm_to_vmem [thread:$0]  %s25, 2048, %s27, [#allocation3], 256, 256, 16
    $region13: #{tpu_custom_call.1} parent=1 // pred_fallthru
      _
    // Predicated region
    $region14: #{tpu_custom_call.1} parent=1 // pred_check
      _
    $region15: #{tpu_custom_call.1} parent=1 // pred_check_branch
      %34 = sbr.rel (0) target = $region17
    $region16: #{tpu_custom_call.1} parent=1 // pred_region
      _
    $region17: #{tpu_custom_call.1} parent=1 // pred_fallthru
      _
    // Predicated region
    $region18: #{tpu_custom_call.1} parent=1 // pred_check
      _
    $region19: #{tpu_custom_call.1} parent=1 // pred_check_branch
      %36 = sbr.rel (0) target = $region21
    $region20: #{tpu_custom_call.1} parent=1 // pred_region
      %38 = vsyncadd [#allocation6], 0
      %s39 = sshll.u32 %s4, 4
      %s40 = int_to_ptr.hbm [resolvable:$true] %s39
      %s41 = sshll.u32 [#allocation5], 4
      %s42 = int_to_ptr.vmem [resolvable:$true] %s41
      %47 = dma.hbm_to_vmem [thread:$0]  %s40, 4096, %s42, [#allocation6], 256, 256, 16
    $region21: #{tpu_custom_call.1} parent=1 // pred_fallthru
      _
    // Predicated region
    $region22: #{tpu_custom_call.1} parent=1 // pred_check
      _
    $region23: #{tpu_custom_call.1} parent=1 // pred_check_branch
      %49 = sbr.rel (0) target = $region25
    $region24: #{tpu_custom_call.1} parent=1 // pred_region
      _
    $region25: #{tpu_custom_call.1} parent=1 // pred_fallthru
      _
    // Predicated region
    $region26: #{tpu_custom_call.1} parent=1 // pred_check
      _
    $region27: #{tpu_custom_call.1} parent=1 // pred_check_branch
      %51 = sbr.rel (0) target = $region29
    $region28: #{tpu_custom_call.1} parent=1 // pred_region
      %53 = vsyncadd [#allocation6], 0
      %s54 = sshll.u32 %s6, 4
      %s55 = int_to_ptr.hbm [resolvable:$true] %s54
      %s56 = sshll.u32 [#allocation7], 4
      %s57 = int_to_ptr.vmem [resolvable:$true] %s56
      %62 = dma.hbm_to_vmem [thread:$0]  %s55, 1024, %s57, [#allocation6], 128, 128, 8
    $region29: #{tpu_custom_call.1} parent=1 // pred_fallthru
      _
    // Predicated region
    $region30: #{tpu_custom_call.1} parent=1 // pred_check
      _
    $region31: #{tpu_custom_call.1} parent=1 // pred_check_branch
      %64 = sbr.rel (0) target = $region33
    $region32: #{tpu_custom_call.1} parent=1 // pred_region
      _
    $region33: #{tpu_custom_call.1} parent=1 // pred_fallthru
      _
    // Predicated region
    $region34: #{tpu_custom_call.1} parent=1 // pred_check
      _
    $region35: #{tpu_custom_call.1} parent=1 // pred_check_branch
      %66 = sbr.rel (0) target = $region37
    $region36: #{tpu_custom_call.1} parent=1 // pred_region
      %68 = dma.done [#allocation3], 2048
    $region37: #{tpu_custom_call.1} parent=1 // pred_fallthru
      _
    // Predicated region
    $region38: #{tpu_custom_call.1} parent=1 // pred_check
      _
    $region39: #{tpu_custom_call.1} parent=1 // pred_check_branch
      %70 = sbr.rel (0) target = $region41
    $region40: #{tpu_custom_call.1} parent=1 // pred_region
      %72 = dma.done [#allocation6], 4096
    $region41: #{tpu_custom_call.1} parent=1 // pred_fallthru
      _
    // Predicated region
    $region42: #{tpu_custom_call.1} parent=1 // pred_check
      _
    $region43: #{tpu_custom_call.1} parent=1 // pred_check_branch
      %74 = sbr.rel (0) target = $region45
    $region44: #{tpu_custom_call.1} parent=1 // pred_region
      %76 = dma.done [#allocation6], 1024
    $region45: #{tpu_custom_call.1} parent=1 // pred_fallthru
      _
    %v77 = vld [vmem:[#allocation2] sm:$0xff]
    %v78 = vld [vmem:[#allocation2 + $0x8] sm:$0xff]
    %v79 = vld [vmem:[#allocation2 + $0x10] sm:$0xff]
    %v80 = vld [vmem:[#allocation2 + $0x18] sm:$0xff]
    %v81 = vld [vmem:[#allocation2 + $0x20] sm:$0xff]
    %v82 = vld [vmem:[#allocation2 + $0x28] sm:$0xff]
    %v83 = vld [vmem:[#allocation2 + $0x30] sm:$0xff]
    %v84 = vld [vmem:[#allocation2 + $0x38] sm:$0xff]
    %v85 = vld [vmem:[#allocation2 + $0x40] sm:$0xff]
    %v86 = vld [vmem:[#allocation2 + $0x48] sm:$0xff]
    %v87 = vld [vmem:[#allocation2 + $0x50] sm:$0xff]
    %v88 = vld [vmem:[#allocation2 + $0x58] sm:$0xff]
    %v89 = vld [vmem:[#allocation2 + $0x60] sm:$0xff]
    %v90 = vld [vmem:[#allocation2 + $0x68] sm:$0xff]
    %v91 = vld [vmem:[#allocation2 + $0x70] sm:$0xff]
    %v92 = vld [vmem:[#allocation2 + $0x78] sm:$0xff]
    %v93 = vld [vmem:[#allocation5] sm:$0xff]
    %v94 = vld [vmem:[#allocation5 + $0x8] sm:$0xff]
    %v95 = vld [vmem:[#allocation5 + $0x10] sm:$0xff]
    %v96 = vld [vmem:[#allocation5 + $0x18] sm:$0xff]
    %v97 = vld [vmem:[#allocation5 + $0x20] sm:$0xff]
    %v98 = vld [vmem:[#allocation5 + $0x28] sm:$0xff]
    %v99 = vld [vmem:[#allocation5 + $0x30] sm:$0xff]
    %v100 = vld [vmem:[#allocation5 + $0x38] sm:$0xff]
    %v101 = vld [vmem:[#allocation5 + $0x40] sm:$0xff]
    %v102 = vld [vmem:[#allocation5 + $0x48] sm:$0xff]
    %v103 = vld [vmem:[#allocation5 + $0x50] sm:$0xff]
    %v104 = vld [vmem:[#allocation5 + $0x58] sm:$0xff]
    %v105 = vld [vmem:[#allocation5 + $0x60] sm:$0xff]
    %v106 = vld [vmem:[#allocation5 + $0x68] sm:$0xff]
    %v107 = vld [vmem:[#allocation5 + $0x70] sm:$0xff]
    %v108 = vld [vmem:[#allocation5 + $0x78] sm:$0xff]
    %v109 = vld [vmem:[#allocation5 + $0x80] sm:$0xff]
    %v110 = vld [vmem:[#allocation5 + $0x88] sm:$0xff]
    %v111 = vld [vmem:[#allocation5 + $0x90] sm:$0xff]
    %v112 = vld [vmem:[#allocation5 + $0x98] sm:$0xff]
    %v113 = vld [vmem:[#allocation5 + $0xa0] sm:$0xff]
    %v114 = vld [vmem:[#allocation5 + $0xa8] sm:$0xff]
    %v115 = vld [vmem:[#allocation5 + $0xb0] sm:$0xff]
    %v116 = vld [vmem:[#allocation5 + $0xb8] sm:$0xff]
    %v117 = vld [vmem:[#allocation5 + $0xc0] sm:$0xff]
    %v118 = vld [vmem:[#allocation5 + $0xc8] sm:$0xff]
    %v119 = vld [vmem:[#allocation5 + $0xd0] sm:$0xff]
    %v120 = vld [vmem:[#allocation5 + $0xd8] sm:$0xff]
    %v121 = vld [vmem:[#allocation5 + $0xe0] sm:$0xff]
    %v122 = vld [vmem:[#allocation5 + $0xe8] sm:$0xff]
    %v123 = vld [vmem:[#allocation5 + $0xf0] sm:$0xff]
    %v124 = vld [vmem:[#allocation5 + $0xf8] sm:$0xff]
    %v125 = vld [vmem:[%s5] sm:$0x3]
    %v126 = vld [vmem:[%s0] sm:$0xff]
    %v127 = vld [vmem:[%s0 + $0x8] sm:$0xff]
    %v128 = vld [vmem:[%s0 + $0x10] sm:$0xff]
    %v129 = vld [vmem:[%s0 + $0x18] sm:$0xff]
    %v130 = vld [vmem:[%s1] sm:$0x3f]
    %v131 = vld [vmem:[%s1 + $0x8] sm:$0x3f]
    %v132 = vld [vmem:[%s3] sm:$0x3]
    %v134 = vperm.slane %v132, 0
    %v135 = vperm.slane %v132, 1
    %vm138 = vcmask 48128
    %v140 = vsel %vm138, %v126, 0
    %v143 = vsel %vm138, %v127, 0
    %v146 = vsel %vm138, %v128, 0
    %v149 = vsel %vm138, %v129, 0
    %vm151 = vcmask 1045504
    %v153 = vsel %vm151, %v130, 0
    %v156 = vsel %vm151, %v131, 0
    %158 = vmatpush.msra.mxu0 0.0
    %159 = vmatpush.msra.mxu0 0.0
    %160 = vmatpush.msra.mxu0 0.0
    %161 = vmatpush.msra.mxu0 0.0
    %162 = vmatpush.msra.mxu0 0.0
    %163 = vmatpush.msra.mxu0 0.0
    %164 = vmatpush.msra.mxu0 0.0
    %165 = vmatpush.msra.mxu0 0.0
    %166 = vmatpush.msra.mxu0 0.0
    %167 = vmatpush.msra.mxu0 0.0
    %168 = vmatpush.msra.mxu0 0.0
    %169 = vmatpush.msra.mxu0 0.0
    %170 = vmatpush.msra.mxu0 0.0
    %171 = vmatpush.msra.mxu0 0.0
    %172 = vmatpush.msra.mxu0 0.0
    %173 = vmatpush.msra.mxu0 %v153
    %174 = vmatmul.f32.gmra.mxu0 %v140
    %v175 = vpop.f32.mrf.mxu0
    %v176 = vadd.f32 %v134, %v175
    %177 = vmatmul.f32.gmra.mxu0 %v143
    %v178 = vpop.f32.mrf.mxu0
    %v179 = vadd.f32 %v134, %v178
    %180 = vmatmul.f32.gmra.mxu0 %v146
    %v181 = vpop.f32.mrf.mxu0
    %v182 = vadd.f32 %v134, %v181
    %183 = vmatmul.f32.gmra.mxu0 %v149
    %v184 = vpop.f32.mrf.mxu0
    %v185 = vadd.f32 %v134, %v184
    %186 = vdwg.mxu0
    %187 = vmatpush.msra.mxu0 0.0
    %188 = vmatpush.msra.mxu0 0.0
    %189 = vmatpush.msra.mxu0 0.0
    %190 = vmatpush.msra.mxu0 0.0
    %191 = vmatpush.msra.mxu0 0.0
    %192 = vmatpush.msra.mxu0 0.0
    %193 = vmatpush.msra.mxu0 0.0
    %194 = vmatpush.msra.mxu0 0.0
    %195 = vmatpush.msra.mxu0 0.0
    %196 = vmatpush.msra.mxu0 0.0
    %197 = vmatpush.msra.mxu0 0.0
    %198 = vmatpush.msra.mxu0 0.0
    %199 = vmatpush.msra.mxu0 0.0
    %200 = vmatpush.msra.mxu0 0.0
    %201 = vmatpush.msra.mxu0 0.0
    %202 = vmatpush.msra.mxu0 %v156
    %203 = vmatmul.f32.gmra.mxu0 %v140
    %v204 = vpop.f32.mrf.mxu0
    %v205 = vadd.f32 %v135, %v204
    %206 = vmatmul.f32.gmra.mxu0 %v143
    %v207 = vpop.f32.mrf.mxu0
    %v208 = vadd.f32 %v135, %v207
    %209 = vmatmul.f32.gmra.mxu0 %v146
    %v210 = vpop.f32.mrf.mxu0
    %v211 = vadd.f32 %v135, %v210
    %212 = vmatmul.f32.gmra.mxu0 %v149
    %v213 = vpop.f32.mrf.mxu0
    %v214 = vadd.f32 %v135, %v213
    %215 = vdwg.mxu0
    %vm216 = vcmask 523264
    %v218 = vsel %vm216, 0.0, 0
    %220 = vmatpush.msra.mxu0 0.0
    %221 = vmatpush.msra.mxu0 0.0
    %222 = vmatpush.msra.mxu0 0.0
    %223 = vmatpush.msra.mxu0 0.0
    %224 = vmatpush.msra.mxu0 0.0
    %225 = vmatpush.msra.mxu0 0.0
    %226 = vmatpush.msra.mxu0 0.0
    %227 = vmatpush.msra.mxu0 0.0
    %228 = vmatpush.msra.mxu0 %v91
    %229 = vmatpush.msra.mxu0 %v89
    %230 = vmatpush.msra.mxu0 %v87
    %231 = vmatpush.msra.mxu0 %v85
    %232 = vmatpush.msra.mxu0 %v83
    %233 = vmatpush.msra.mxu0 %v81
    %234 = vmatpush.msra.mxu0 %v79
    %235 = vmatpush.msra.mxu0 %v77
    %236 = vmatmul.f32.gmra.mxu0 %v218
    %v237 = vpop.f32.mrf.mxu0
    %v238 = vadd.f32 0.0, %v237
    %239 = vdwg.mxu0
    %240 = vmatpush.msra.mxu0 0.0
    %241 = vmatpush.msra.mxu0 0.0
    %242 = vmatpush.msra.mxu0 0.0
    %243 = vmatpush.msra.mxu0 0.0
    %244 = vmatpush.msra.mxu0 0.0
    %245 = vmatpush.msra.mxu0 0.0
    %246 = vmatpush.msra.mxu0 0.0
    %247 = vmatpush.msra.mxu0 0.0
    %248 = vmatpush.msra.mxu0 %v92
    %249 = vmatpush.msra.mxu0 %v90
    %250 = vmatpush.msra.mxu0 %v88
    %251 = vmatpush.msra.mxu0 %v86
    %252 = vmatpush.msra.mxu0 %v84
    %253 = vmatpush.msra.mxu0 %v82
    %254 = vmatpush.msra.mxu0 %v80
    %255 = vmatpush.msra.mxu0 %v78
    %256 = vmatmul.f32.gmra.mxu0 %v218
    %v257 = vpop.f32.mrf.mxu0
    %v258 = vadd.f32 0.0, %v257
    %259 = vdwg.mxu0
    %v260 = vadd.f32 %v176, %v238
    %v261 = vadd.f32 %v205, %v258
    %v262 = vxor.u32 %v260, 2147483648
    %v263 = vxor.u32 %v261, 2147483648
    %v264 = vmul.f32 %v262, 1.442695
    %v265 = vpow.pop %v264
    %v266 = vmul.f32 %v263, 1.442695
    %v267 = vpow.pop %v266
    %v268 = vadd.f32 %v265, 1.0
    %v269 = vadd.f32 %v267, 1.0
    %v270 = vrcp.pop %v268
    %v271 = vmul.f32 %v268, %v270
    %v272 = vsub.f32 1.0, %v271
    %v273 = vmul.f32 %v270, %v272
    %v274 = vadd.f32 %v270, %v273
    %vm275 = vweird.f32 %v268
    %vm276 = vweird.f32 %v270
    %vm277 = vmor %vm275, %vm276
    %v278 = vsel %vm277, %v270, %v274
    %v279 = vand.u32 2147483647, %v268
    %vm280 = vcmp.eq.f32.partialorder %v279, 8.507059e+37
    %v281 = vand.u32 %v268, 2147483648
    %v282 = vor.u32 1.1754944e-38, %v281
    %v283 = vsel %vm280, %v282, %v278
    %v284 = vmul.f32 1.0, %v283
    %v285 = vrcp.pop %v269
    %v286 = vmul.f32 %v269, %v285
    %v287 = vsub.f32 1.0, %v286
    %v288 = vmul.f32 %v285, %v287
    %v289 = vadd.f32 %v285, %v288
    %vm290 = vweird.f32 %v269
    %vm291 = vweird.f32 %v285
    %vm292 = vmor %vm290, %vm291
    %v293 = vsel %vm292, %v285, %v289
    %v294 = vand.u32 2147483647, %v269
    %vm295 = vcmp.eq.f32.partialorder %v294, 8.507059e+37
    %v296 = vand.u32 %v269, 2147483648
    %v297 = vor.u32 1.1754944e-38, %v296
    %v298 = vsel %vm295, %v297, %v293
    %v299 = vmul.f32 1.0, %v298
    %v300 = vtanh.pop %v261
    %v301 = vmul.f32 %v284, 0.0
    %v302 = vmul.f32 %v284, %v300
    %304 = vrot.lane.b32.xlu0 %v302, 64
    %v305 = vpop.permute.xlu0 %304
    %v307 = vadd.f32 %v301, %v305
    %v308 = vtanh.pop %v307
    %v309 = vmul.f32 %v299, %v308
    %311 = vrot.lane.b32.xlu0 %v309, 64
    %v312 = vpop.permute.xlu0 %311
    %v314 = vsel %vm216, %v312, 0.0
    %v316 = vperm.slane %v125, 0
    %v317 = vperm.slane %v125, 1
    %320 = vmatpush.msra.mxu0 %v123
    %321 = vmatpush.msra.mxu0 %v121
    %322 = vmatpush.msra.mxu0 %v119
    %323 = vmatpush.msra.mxu0 %v117
    %324 = vmatpush.msra.mxu0 %v115
    %325 = vmatpush.msra.mxu0 %v113
    %326 = vmatpush.msra.mxu0 %v111
    %327 = vmatpush.msra.mxu0 %v109
    %328 = vmatpush.msra.mxu0 %v107
    %329 = vmatpush.msra.mxu0 %v105
    %330 = vmatpush.msra.mxu0 %v103
    %331 = vmatpush.msra.mxu0 %v101
    %332 = vmatpush.msra.mxu0 %v99
    %333 = vmatpush.msra.mxu0 %v97
    %334 = vmatpush.msra.mxu0 %v95
    %335 = vmatpush.msra.mxu0 %v93
    %336 = vmatmul.f32.gmra.mxu0 %v314
    %v337 = vpop.f32.mrf.mxu0
    %v338 = vadd.f32 %v316, %v337
    %339 = vdwg.mxu0
    %340 = vmatpush.msra.mxu0 %v124
    %341 = vmatpush.msra.mxu0 %v122
    %342 = vmatpush.msra.mxu0 %v120
    %343 = vmatpush.msra.mxu0 %v118
    %344 = vmatpush.msra.mxu0 %v116
    %345 = vmatpush.msra.mxu0 %v114
    %346 = vmatpush.msra.mxu0 %v112
    %347 = vmatpush.msra.mxu0 %v110
    %348 = vmatpush.msra.mxu0 %v108
    %349 = vmatpush.msra.mxu0 %v106
    %350 = vmatpush.msra.mxu0 %v104
    %351 = vmatpush.msra.mxu0 %v102
    %352 = vmatpush.msra.mxu0 %v100
    %353 = vmatpush.msra.mxu0 %v98
    %354 = vmatpush.msra.mxu0 %v96
    %355 = vmatpush.msra.mxu0 %v94
    %356 = vmatmul.f32.gmra.mxu0 %v314
    %v357 = vpop.f32.mrf.mxu0
    %v358 = vadd.f32 %v317, %v357
    %359 = vdwg.mxu0
    %v360 = vxor.u32 %v338, 2147483648
    %v361 = vxor.u32 %v358, 2147483648
    %v362 = vmul.f32 %v360, 1.442695
    %v363 = vpow.pop %v362
    %v364 = vmul.f32 %v361, 1.442695
    %v365 = vpow.pop %v364
    %v366 = vadd.f32 %v363, 1.0
    %v367 = vadd.f32 %v365, 1.0
    %v368 = vrcp.pop %v366
    %v369 = vmul.f32 %v366, %v368
    %v370 = vsub.f32 1.0, %v369
    %v371 = vmul.f32 %v368, %v370
    %v372 = vadd.f32 %v368, %v371
    %vm373 = vweird.f32 %v366
    %vm374 = vweird.f32 %v368
    %vm375 = vmor %vm373, %vm374
    %v376 = vsel %vm375, %v368, %v372
    %v377 = vand.u32 2147483647, %v366
    %vm378 = vcmp.eq.f32.partialorder %v377, 8.507059e+37
    %v379 = vand.u32 %v366, 2147483648
    %v380 = vor.u32 1.1754944e-38, %v379
    %v381 = vsel %vm378, %v380, %v376
    %v382 = vmul.f32 1.0, %v381
    %v383 = vrcp.pop %v367
    %v384 = vmul.f32 %v367, %v383
    %v385 = vsub.f32 1.0, %v384
    %v386 = vmul.f32 %v383, %v385
    %v387 = vadd.f32 %v383, %v386
    %vm388 = vweird.f32 %v367
    %vm389 = vweird.f32 %v383
    %vm390 = vmor %vm388, %vm389
    %v391 = vsel %vm390, %v383, %v387
    %v392 = vand.u32 2147483647, %v367
    %vm393 = vcmp.eq.f32.partialorder %v392, 8.507059e+37
    %v394 = vand.u32 %v367, 2147483648
    %v395 = vor.u32 1.1754944e-38, %v394
    %v396 = vsel %vm393, %v395, %v391
    %v397 = vmul.f32 1.0, %v396
    %v398 = vtanh.pop %v358
    %v399 = vmul.f32 %v382, 0.0
    %v400 = vmul.f32 %v382, %v398
    %402 = vrot.lane.b32.xlu0 %v400, 64
    %v403 = vpop.permute.xlu0 %402
    %v405 = vadd.f32 %v399, %v403
    %v406 = vtanh.pop %v405
    %v407 = vmul.f32 %v397, %v406
    %v408 = vsel %vm216, %v312, 0
    %410 = vmatpush.msra.mxu0 0.0
    %411 = vmatpush.msra.mxu0 0.0
    %412 = vmatpush.msra.mxu0 0.0
    %413 = vmatpush.msra.mxu0 0.0
    %414 = vmatpush.msra.mxu0 0.0
    %415 = vmatpush.msra.mxu0 0.0
    %416 = vmatpush.msra.mxu0 0.0
    %417 = vmatpush.msra.mxu0 0.0
    %418 = vmatpush.msra.mxu0 %v91
    %419 = vmatpush.msra.mxu0 %v89
    %420 = vmatpush.msra.mxu0 %v87
    %421 = vmatpush.msra.mxu0 %v85
    %422 = vmatpush.msra.mxu0 %v83
    %423 = vmatpush.msra.mxu0 %v81
    %424 = vmatpush.msra.mxu0 %v79
    %425 = vmatpush.msra.mxu0 %v77
    %426 = vmatmul.f32.gmra.mxu0 %v408
    %v427 = vpop.f32.mrf.mxu0
    %v428 = vadd.f32 0.0, %v427
    %429 = vdwg.mxu0
    %430 = vmatpush.msra.mxu0 0.0
    %431 = vmatpush.msra.mxu0 0.0
    %432 = vmatpush.msra.mxu0 0.0
    %433 = vmatpush.msra.mxu0 0.0
    %434 = vmatpush.msra.mxu0 0.0
    %435 = vmatpush.msra.mxu0 0.0
    %436 = vmatpush.msra.mxu0 0.0
    %437 = vmatpush.msra.mxu0 0.0
    %438 = vmatpush.msra.mxu0 %v92
    %439 = vmatpush.msra.mxu0 %v90
    %440 = vmatpush.msra.mxu0 %v88
    %441 = vmatpush.msra.mxu0 %v86
    %442 = vmatpush.msra.mxu0 %v84
    %443 = vmatpush.msra.mxu0 %v82
    %444 = vmatpush.msra.mxu0 %v80
    %445 = vmatpush.msra.mxu0 %v78
    %446 = vmatmul.f32.gmra.mxu0 %v408
    %v447 = vpop.f32.mrf.mxu0
    %v448 = vadd.f32 0.0, %v447
    %449 = vdwg.mxu0
    %v452 = vrot.slane %v428, 4
    %v453 = vrot.slane %v448, 4
    %v456 = vadd.f32 %v176, %v452
    %v457 = vadd.f32 %v205, %v453
    %v458 = vxor.u32 %v456, 2147483648
    %v459 = vxor.u32 %v457, 2147483648
    %v460 = vmul.f32 %v458, 1.442695
    %v461 = vpow.pop %v460
    %v462 = vmul.f32 %v459, 1.442695
    %v463 = vpow.pop %v462
    %v464 = vadd.f32 %v461, 1.0
    %v465 = vadd.f32 %v463, 1.0
    %v466 = vrcp.pop %v464
    %v467 = vmul.f32 %v464, %v466
    %v468 = vsub.f32 1.0, %v467
    %v469 = vmul.f32 %v466, %v468
    %v470 = vadd.f32 %v466, %v469
    %vm471 = vweird.f32 %v464
    %vm472 = vweird.f32 %v466
    %vm473 = vmor %vm471, %vm472
    %v474 = vsel %vm473, %v466, %v470
    %v475 = vand.u32 2147483647, %v464
    %vm476 = vcmp.eq.f32.partialorder %v475, 8.507059e+37
    %v477 = vand.u32 %v464, 2147483648
    %v478 = vor.u32 1.1754944e-38, %v477
    %v479 = vsel %vm476, %v478, %v474
    %v480 = vmul.f32 1.0, %v479
    %v481 = vrcp.pop %v465
    %v482 = vmul.f32 %v465, %v481
    %v483 = vsub.f32 1.0, %v482
    %v484 = vmul.f32 %v481, %v483
    %v485 = vadd.f32 %v481, %v484
    %vm486 = vweird.f32 %v465
    %vm487 = vweird.f32 %v481
    %vm488 = vmor %vm486, %vm487
    %v489 = vsel %vm488, %v481, %v485
    %v490 = vand.u32 2147483647, %v465
    %vm491 = vcmp.eq.f32.partialorder %v490, 8.507059e+37
    %v492 = vand.u32 %v465, 2147483648
    %v493 = vor.u32 1.1754944e-38, %v492
    %v494 = vsel %vm491, %v493, %v489
    %v495 = vmul.f32 1.0, %v494
    %v496 = vtanh.pop %v457
    %v498 = vrot.slane %v307, 4
    %v500 = vmul.f32 %v480, %v498
    %v501 = vmul.f32 %v480, %v496
    %503 = vrot.lane.b32.xlu0 %v501, 64
    %v504 = vpop.permute.xlu0 %503
    %v506 = vadd.f32 %v500, %v504
    %v507 = vtanh.pop %v506
    %v508 = vmul.f32 %v495, %v507
    %510 = vrot.lane.b32.xlu0 %v508, 64
    %v511 = vpop.permute.xlu0 %510
    %v514 = vrot.slane %v407, 4
    %v516 = vsel %vm216, %v511, %v514
    %v518 = vrot.slane %v516, 4
    %520 = vmatpush.msra.mxu0 %v123
    %521 = vmatpush.msra.mxu0 %v121
    %522 = vmatpush.msra.mxu0 %v119
    %523 = vmatpush.msra.mxu0 %v117
    %524 = vmatpush.msra.mxu0 %v115
    %525 = vmatpush.msra.mxu0 %v113
    %526 = vmatpush.msra.mxu0 %v111
    %527 = vmatpush.msra.mxu0 %v109
    %528 = vmatpush.msra.mxu0 %v107
    %529 = vmatpush.msra.mxu0 %v105
    %530 = vmatpush.msra.mxu0 %v103
    %531 = vmatpush.msra.mxu0 %v101
    %532 = vmatpush.msra.mxu0 %v99
    %533 = vmatpush.msra.mxu0 %v97
    %534 = vmatpush.msra.mxu0 %v95
    %535 = vmatpush.msra.mxu0 %v93
    %536 = vmatmul.f32.gmra.mxu0 %v518
    %v537 = vpop.f32.mrf.mxu0
    %v538 = vadd.f32 %v316, %v537
    %539 = vdwg.mxu0
    %540 = vmatpush.msra.mxu0 %v124
    %541 = vmatpush.msra.mxu0 %v122
    %542 = vmatpush.msra.mxu0 %v120
    %543 = vmatpush.msra.mxu0 %v118
    %544 = vmatpush.msra.mxu0 %v116
    %545 = vmatpush.msra.mxu0 %v114
    %546 = vmatpush.msra.mxu0 %v112
    %547 = vmatpush.msra.mxu0 %v110
    %548 = vmatpush.msra.mxu0 %v108
    %549 = vmatpush.msra.mxu0 %v106
    %550 = vmatpush.msra.mxu0 %v104
    %551 = vmatpush.msra.mxu0 %v102
    %552 = vmatpush.msra.mxu0 %v100
    %553 = vmatpush.msra.mxu0 %v98
    %554 = vmatpush.msra.mxu0 %v96
    %555 = vmatpush.msra.mxu0 %v94
    %556 = vmatmul.f32.gmra.mxu0 %v518
    %v557 = vpop.f32.mrf.mxu0
    %v558 = vadd.f32 %v317, %v557
    %559 = vdwg.mxu0
    %v560 = vxor.u32 %v538, 2147483648
    %v561 = vxor.u32 %v558, 2147483648
    %v562 = vmul.f32 %v560, 1.442695
    %v563 = vpow.pop %v562
    %v564 = vmul.f32 %v561, 1.442695
    %v565 = vpow.pop %v564
    %v566 = vadd.f32 %v563, 1.0
    %v567 = vadd.f32 %v565, 1.0
    %v568 = vrcp.pop %v566
    %v569 = vmul.f32 %v566, %v568
    %v570 = vsub.f32 1.0, %v569
    %v571 = vmul.f32 %v568, %v570
    %v572 = vadd.f32 %v568, %v571
    %vm573 = vweird.f32 %v566
    %vm574 = vweird.f32 %v568
    %vm575 = vmor %vm573, %vm574
    %v576 = vsel %vm575, %v568, %v572
    %v577 = vand.u32 2147483647, %v566
    %vm578 = vcmp.eq.f32.partialorder %v577, 8.507059e+37
    %v579 = vand.u32 %v566, 2147483648
    %v580 = vor.u32 1.1754944e-38, %v579
    %v581 = vsel %vm578, %v580, %v576
    %v582 = vmul.f32 1.0, %v581
    %v583 = vrcp.pop %v567
    %v584 = vmul.f32 %v567, %v583
    %v585 = vsub.f32 1.0, %v584
    %v586 = vmul.f32 %v583, %v585
    %v587 = vadd.f32 %v583, %v586
    %vm588 = vweird.f32 %v567
    %vm589 = vweird.f32 %v583
    %vm590 = vmor %vm588, %vm589
    %v591 = vsel %vm590, %v583, %v587
    %v592 = vand.u32 2147483647, %v567
    %vm593 = vcmp.eq.f32.partialorder %v592, 8.507059e+37
    %v594 = vand.u32 %v567, 2147483648
    %v595 = vor.u32 1.1754944e-38, %v594
    %v596 = vsel %vm593, %v595, %v591
    %v597 = vmul.f32 1.0, %v596
    %v598 = vtanh.pop %v558
    %v599 = vmul.f32 %v582, %v405
    %v600 = vmul.f32 %v582, %v598
    %602 = vrot.lane.b32.xlu0 %v600, 64
    %v603 = vpop.permute.xlu0 %602
    %v605 = vadd.f32 %v599, %v603
    %v606 = vtanh.pop %v605
    %v607 = vmul.f32 %v597, %v606
    %v608 = vrot.slane %v508, 4
    %609 = vrot.lane.b32.xlu0 %v608, 64
    %v610 = vpop.permute.xlu0 %609
    %v611 = vsel %vm216, %v610, 0
    %613 = vmatpush.msra.mxu0 0.0
    %614 = vmatpush.msra.mxu0 0.0
    %615 = vmatpush.msra.mxu0 0.0
    %616 = vmatpush.msra.mxu0 0.0
    %617 = vmatpush.msra.mxu0 0.0
    %618 = vmatpush.msra.mxu0 0.0
    %619 = vmatpush.msra.mxu0 0.0
    %620 = vmatpush.msra.mxu0 0.0
    %621 = vmatpush.msra.mxu0 %v91
    %622 = vmatpush.msra.mxu0 %v89
    %623 = vmatpush.msra.mxu0 %v87
    %624 = vmatpush.msra.mxu0 %v85
    %625 = vmatpush.msra.mxu0 %v83
    %626 = vmatpush.msra.mxu0 %v81
    %627 = vmatpush.msra.mxu0 %v79
    %628 = vmatpush.msra.mxu0 %v77
    %629 = vmatmul.f32.gmra.mxu0 %v611
    %v630 = vpop.f32.mrf.mxu0
    %v631 = vadd.f32 0.0, %v630
    %632 = vdwg.mxu0
    %633 = vmatpush.msra.mxu0 0.0
    %634 = vmatpush.msra.mxu0 0.0
    %635 = vmatpush.msra.mxu0 0.0
    %636 = vmatpush.msra.mxu0 0.0
    %637 = vmatpush.msra.mxu0 0.0
    %638 = vmatpush.msra.mxu0 0.0
    %639 = vmatpush.msra.mxu0 0.0
    %640 = vmatpush.msra.mxu0 0.0
    %641 = vmatpush.msra.mxu0 %v92
    %642 = vmatpush.msra.mxu0 %v90
    %643 = vmatpush.msra.mxu0 %v88
    %644 = vmatpush.msra.mxu0 %v86
    %645 = vmatpush.msra.mxu0 %v84
    %646 = vmatpush.msra.mxu0 %v82
    %647 = vmatpush.msra.mxu0 %v80
    %648 = vmatpush.msra.mxu0 %v78
    %649 = vmatmul.f32.gmra.mxu0 %v611
    %v650 = vpop.f32.mrf.mxu0
    %v651 = vadd.f32 0.0, %v650
    %652 = vdwg.mxu0
    %v653 = vadd.f32 %v179, %v631
    %v654 = vadd.f32 %v208, %v651
    %v655 = vxor.u32 %v653, 2147483648
    %v656 = vxor.u32 %v654, 2147483648
    %v657 = vmul.f32 %v655, 1.442695
    %v658 = vpow.pop %v657
    %v659 = vmul.f32 %v656, 1.442695
    %v660 = vpow.pop %v659
    %v661 = vadd.f32 %v658, 1.0
    %v662 = vadd.f32 %v660, 1.0
    %v663 = vrcp.pop %v661
    %v664 = vmul.f32 %v661, %v663
    %v665 = vsub.f32 1.0, %v664
    %v666 = vmul.f32 %v663, %v665
    %v667 = vadd.f32 %v663, %v666
    %vm668 = vweird.f32 %v661
    %vm669 = vweird.f32 %v663
    %vm670 = vmor %vm668, %vm669
    %v671 = vsel %vm670, %v663, %v667
    %v672 = vand.u32 2147483647, %v661
    %vm673 = vcmp.eq.f32.partialorder %v672, 8.507059e+37
    %v674 = vand.u32 %v661, 2147483648
    %v675 = vor.u32 1.1754944e-38, %v674
    %v676 = vsel %vm673, %v675, %v671
    %v677 = vmul.f32 1.0, %v676
    %v678 = vrcp.pop %v662
    %v679 = vmul.f32 %v662, %v678
    %v680 = vsub.f32 1.0, %v679
    %v681 = vmul.f32 %v678, %v680
    %v682 = vadd.f32 %v678, %v681
    %vm683 = vweird.f32 %v662
    %vm684 = vweird.f32 %v678
    %vm685 = vmor %vm683, %vm684
    %v686 = vsel %vm685, %v678, %v682
    %v687 = vand.u32 2147483647, %v662
    %vm688 = vcmp.eq.f32.partialorder %v687, 8.507059e+37
    %v689 = vand.u32 %v662, 2147483648
    %v690 = vor.u32 1.1754944e-38, %v689
    %v691 = vsel %vm688, %v690, %v686
    %v692 = vmul.f32 1.0, %v691
    %v693 = vtanh.pop %v654
    %v695 = vrot.slane %v506, 4
    %v697 = vmul.f32 %v677, %v695
    %v698 = vmul.f32 %v677, %v693
    %700 = vrot.lane.b32.xlu0 %v698, 64
    %v701 = vpop.permute.xlu0 %700
    %v703 = vadd.f32 %v697, %v701
    %v704 = vtanh.pop %v703
    %v705 = vmul.f32 %v692, %v704
    %707 = vrot.lane.b32.xlu0 %v705, 64
    %v708 = vpop.permute.xlu0 %707
    %v710 = vsel %vm216, %v708, %v607
    %711 = vmatpush.msra.mxu0 %v123
    %712 = vmatpush.msra.mxu0 %v121
    %713 = vmatpush.msra.mxu0 %v119
    %714 = vmatpush.msra.mxu0 %v117
    %715 = vmatpush.msra.mxu0 %v115
    %716 = vmatpush.msra.mxu0 %v113
    %717 = vmatpush.msra.mxu0 %v111
    %718 = vmatpush.msra.mxu0 %v109
    %719 = vmatpush.msra.mxu0 %v107
    %720 = vmatpush.msra.mxu0 %v105
    %721 = vmatpush.msra.mxu0 %v103
    %722 = vmatpush.msra.mxu0 %v101
    %723 = vmatpush.msra.mxu0 %v99
    %724 = vmatpush.msra.mxu0 %v97
    %725 = vmatpush.msra.mxu0 %v95
    %726 = vmatpush.msra.mxu0 %v93
    %727 = vmatmul.f32.gmra.mxu0 %v710
    %v728 = vpop.f32.mrf.mxu0
    %v729 = vadd.f32 %v316, %v728
    %730 = vdwg.mxu0
    %731 = vmatpush.msra.mxu0 %v124
    %732 = vmatpush.msra.mxu0 %v122
    %733 = vmatpush.msra.mxu0 %v120
    %734 = vmatpush.msra.mxu0 %v118
    %735 = vmatpush.msra.mxu0 %v116
    %736 = vmatpush.msra.mxu0 %v114
    %737 = vmatpush.msra.mxu0 %v112
    %738 = vmatpush.msra.mxu0 %v110
    %739 = vmatpush.msra.mxu0 %v108
    %740 = vmatpush.msra.mxu0 %v106
    %741 = vmatpush.msra.mxu0 %v104
    %742 = vmatpush.msra.mxu0 %v102
    %743 = vmatpush.msra.mxu0 %v100
    %744 = vmatpush.msra.mxu0 %v98
    %745 = vmatpush.msra.mxu0 %v96
    %746 = vmatpush.msra.mxu0 %v94
    %747 = vmatmul.f32.gmra.mxu0 %v710
    %v748 = vpop.f32.mrf.mxu0
    %v749 = vadd.f32 %v317, %v748
    %750 = vdwg.mxu0
    %v751 = vxor.u32 %v729, 2147483648
    %v752 = vxor.u32 %v749, 2147483648
    %v753 = vmul.f32 %v751, 1.442695
    %v754 = vpow.pop %v753
    %v755 = vmul.f32 %v752, 1.442695
    %v756 = vpow.pop %v755
    %v757 = vadd.f32 %v754, 1.0
    %v758 = vadd.f32 %v756, 1.0
    %v759 = vrcp.pop %v757
    %v760 = vmul.f32 %v757, %v759
    %v761 = vsub.f32 1.0, %v760
    %v762 = vmul.f32 %v759, %v761
    %v763 = vadd.f32 %v759, %v762
    %vm764 = vweird.f32 %v757
    %vm765 = vweird.f32 %v759
    %vm766 = vmor %vm764, %vm765
    %v767 = vsel %vm766, %v759, %v763
    %v768 = vand.u32 2147483647, %v757
    %vm769 = vcmp.eq.f32.partialorder %v768, 8.507059e+37
    %v770 = vand.u32 %v757, 2147483648
    %v771 = vor.u32 1.1754944e-38, %v770
    %v772 = vsel %vm769, %v771, %v767
    %v773 = vmul.f32 1.0, %v772
    %v774 = vrcp.pop %v758
    %v775 = vmul.f32 %v758, %v774
    %v776 = vsub.f32 1.0, %v775
    %v777 = vmul.f32 %v774, %v776
    %v778 = vadd.f32 %v774, %v777
    %vm779 = vweird.f32 %v758
    %vm780 = vweird.f32 %v774
    %vm781 = vmor %vm779, %vm780
    %v782 = vsel %vm781, %v774, %v778
    %v783 = vand.u32 2147483647, %v758
    %vm784 = vcmp.eq.f32.partialorder %v783, 8.507059e+37
    %v785 = vand.u32 %v758, 2147483648
    %v786 = vor.u32 1.1754944e-38, %v785
    %v787 = vsel %vm784, %v786, %v782
    %v788 = vmul.f32 1.0, %v787
    %v789 = vtanh.pop %v749
    %v790 = vmul.f32 %v773, %v605
    %v791 = vmul.f32 %v773, %v789
    %793 = vrot.lane.b32.xlu0 %v791, 64
    %v794 = vpop.permute.xlu0 %793
    %v796 = vadd.f32 %v790, %v794
    %v797 = vtanh.pop %v796
    %v798 = vmul.f32 %v788, %v797
    %v799 = vsel %vm216, %v708, 0
    %801 = vmatpush.msra.mxu0 0.0
    %802 = vmatpush.msra.mxu0 0.0
    %803 = vmatpush.msra.mxu0 0.0
    %804 = vmatpush.msra.mxu0 0.0
    %805 = vmatpush.msra.mxu0 0.0
    %806 = vmatpush.msra.mxu0 0.0
    %807 = vmatpush.msra.mxu0 0.0
    %808 = vmatpush.msra.mxu0 0.0
    %809 = vmatpush.msra.mxu0 %v91
    %810 = vmatpush.msra.mxu0 %v89
    %811 = vmatpush.msra.mxu0 %v87
    %812 = vmatpush.msra.mxu0 %v85
    %813 = vmatpush.msra.mxu0 %v83
    %814 = vmatpush.msra.mxu0 %v81
    %815 = vmatpush.msra.mxu0 %v79
    %816 = vmatpush.msra.mxu0 %v77
    %817 = vmatmul.f32.gmra.mxu0 %v799
    %v818 = vpop.f32.mrf.mxu0
    %v819 = vadd.f32 0.0, %v818
    %820 = vdwg.mxu0
    %821 = vmatpush.msra.mxu0 0.0
    %822 = vmatpush.msra.mxu0 0.0
    %823 = vmatpush.msra.mxu0 0.0
    %824 = vmatpush.msra.mxu0 0.0
    %825 = vmatpush.msra.mxu0 0.0
    %826 = vmatpush.msra.mxu0 0.0
    %827 = vmatpush.msra.mxu0 0.0
    %828 = vmatpush.msra.mxu0 0.0
    %829 = vmatpush.msra.mxu0 %v92
    %830 = vmatpush.msra.mxu0 %v90
    %831 = vmatpush.msra.mxu0 %v88
    %832 = vmatpush.msra.mxu0 %v86
    %833 = vmatpush.msra.mxu0 %v84
    %834 = vmatpush.msra.mxu0 %v82
    %835 = vmatpush.msra.mxu0 %v80
    %836 = vmatpush.msra.mxu0 %v78
    %837 = vmatmul.f32.gmra.mxu0 %v799
    %v838 = vpop.f32.mrf.mxu0
    %v839 = vadd.f32 0.0, %v838
    %840 = vdwg.mxu0
    %v843 = vrot.slane %v819, 4
    %v844 = vrot.slane %v839, 4
    %v847 = vadd.f32 %v179, %v843
    %v848 = vadd.f32 %v208, %v844
    %v849 = vxor.u32 %v847, 2147483648
    %v850 = vxor.u32 %v848, 2147483648
    %v851 = vmul.f32 %v849, 1.442695
    %v852 = vpow.pop %v851
    %v853 = vmul.f32 %v850, 1.442695
    %v854 = vpow.pop %v853
    %v855 = vadd.f32 %v852, 1.0
    %v856 = vadd.f32 %v854, 1.0
    %v857 = vrcp.pop %v855
    %v858 = vmul.f32 %v855, %v857
    %v859 = vsub.f32 1.0, %v858
    %v860 = vmul.f32 %v857, %v859
    %v861 = vadd.f32 %v857, %v860
    %vm862 = vweird.f32 %v855
    %vm863 = vweird.f32 %v857
    %vm864 = vmor %vm862, %vm863
    %v865 = vsel %vm864, %v857, %v861
    %v866 = vand.u32 2147483647, %v855
    %vm867 = vcmp.eq.f32.partialorder %v866, 8.507059e+37
    %v868 = vand.u32 %v855, 2147483648
    %v869 = vor.u32 1.1754944e-38, %v868
    %v870 = vsel %vm867, %v869, %v865
    %v871 = vmul.f32 1.0, %v870
    %v872 = vrcp.pop %v856
    %v873 = vmul.f32 %v856, %v872
    %v874 = vsub.f32 1.0, %v873
    %v875 = vmul.f32 %v872, %v874
    %v876 = vadd.f32 %v872, %v875
    %vm877 = vweird.f32 %v856
    %vm878 = vweird.f32 %v872
    %vm879 = vmor %vm877, %vm878
    %v880 = vsel %vm879, %v872, %v876
    %v881 = vand.u32 2147483647, %v856
    %vm882 = vcmp.eq.f32.partialorder %v881, 8.507059e+37
    %v883 = vand.u32 %v856, 2147483648
    %v884 = vor.u32 1.1754944e-38, %v883
    %v885 = vsel %vm882, %v884, %v880
    %v886 = vmul.f32 1.0, %v885
    %v887 = vtanh.pop %v848
    %v889 = vrot.slane %v703, 4
    %v891 = vmul.f32 %v871, %v889
    %v892 = vmul.f32 %v871, %v887
    %894 = vrot.lane.b32.xlu0 %v892, 64
    %v895 = vpop.permute.xlu0 %894
    %v897 = vadd.f32 %v891, %v895
    %v898 = vtanh.pop %v897
    %v899 = vmul.f32 %v886, %v898
    %901 = vrot.lane.b32.xlu0 %v899, 64
    %v902 = vpop.permute.xlu0 %901
    %v905 = vrot.slane %v798, 4
    %v907 = vsel %vm216, %v902, %v905
    %v909 = vrot.slane %v907, 4
    %911 = vmatpush.msra.mxu0 %v123
    %912 = vmatpush.msra.mxu0 %v121
    %913 = vmatpush.msra.mxu0 %v119
    %914 = vmatpush.msra.mxu0 %v117
    %915 = vmatpush.msra.mxu0 %v115
    %916 = vmatpush.msra.mxu0 %v113
    %917 = vmatpush.msra.mxu0 %v111
    %918 = vmatpush.msra.mxu0 %v109
    %919 = vmatpush.msra.mxu0 %v107
    %920 = vmatpush.msra.mxu0 %v105
    %921 = vmatpush.msra.mxu0 %v103
    %922 = vmatpush.msra.mxu0 %v101
    %923 = vmatpush.msra.mxu0 %v99
    %924 = vmatpush.msra.mxu0 %v97
    %925 = vmatpush.msra.mxu0 %v95
    %926 = vmatpush.msra.mxu0 %v93
    %927 = vmatmul.f32.gmra.mxu0 %v909
    %v928 = vpop.f32.mrf.mxu0
    %v929 = vadd.f32 %v316, %v928
    %930 = vdwg.mxu0
    %931 = vmatpush.msra.mxu0 %v124
    %932 = vmatpush.msra.mxu0 %v122
    %933 = vmatpush.msra.mxu0 %v120
    %934 = vmatpush.msra.mxu0 %v118
    %935 = vmatpush.msra.mxu0 %v116
    %936 = vmatpush.msra.mxu0 %v114
    %937 = vmatpush.msra.mxu0 %v112
    %938 = vmatpush.msra.mxu0 %v110
    %939 = vmatpush.msra.mxu0 %v108
    %940 = vmatpush.msra.mxu0 %v106
    %941 = vmatpush.msra.mxu0 %v104
    %942 = vmatpush.msra.mxu0 %v102
    %943 = vmatpush.msra.mxu0 %v100
    %944 = vmatpush.msra.mxu0 %v98
    %945 = vmatpush.msra.mxu0 %v96
    %946 = vmatpush.msra.mxu0 %v94
    %947 = vmatmul.f32.gmra.mxu0 %v909
    %v948 = vpop.f32.mrf.mxu0
    %v949 = vadd.f32 %v317, %v948
    %950 = vdwg.mxu0
    %v951 = vxor.u32 %v929, 2147483648
    %v952 = vxor.u32 %v949, 2147483648
    %v953 = vmul.f32 %v951, 1.442695
    %v954 = vpow.pop %v953
    %v955 = vmul.f32 %v952, 1.442695
    %v956 = vpow.pop %v955
    %v957 = vadd.f32 %v954, 1.0
    %v958 = vadd.f32 %v956, 1.0
    %v959 = vrcp.pop %v957
    %v960 = vmul.f32 %v957, %v959
    %v961 = vsub.f32 1.0, %v960
    %v962 = vmul.f32 %v959, %v961
    %v963 = vadd.f32 %v959, %v962
    %vm964 = vweird.f32 %v957
    %vm965 = vweird.f32 %v959
    %vm966 = vmor %vm964, %vm965
    %v967 = vsel %vm966, %v959, %v963
    %v968 = vand.u32 2147483647, %v957
    %vm969 = vcmp.eq.f32.partialorder %v968, 8.507059e+37
    %v970 = vand.u32 %v957, 2147483648
    %v971 = vor.u32 1.1754944e-38, %v970
    %v972 = vsel %vm969, %v971, %v967
    %v973 = vmul.f32 1.0, %v972
    %v974 = vrcp.pop %v958
    %v975 = vmul.f32 %v958, %v974
    %v976 = vsub.f32 1.0, %v975
    %v977 = vmul.f32 %v974, %v976
    %v978 = vadd.f32 %v974, %v977
    %vm979 = vweird.f32 %v958
    %vm980 = vweird.f32 %v974
    %vm981 = vmor %vm979, %vm980
    %v982 = vsel %vm981, %v974, %v978
    %v983 = vand.u32 2147483647, %v958
    %vm984 = vcmp.eq.f32.partialorder %v983, 8.507059e+37
    %v985 = vand.u32 %v958, 2147483648
    %v986 = vor.u32 1.1754944e-38, %v985
    %v987 = vsel %vm984, %v986, %v982
    %v988 = vmul.f32 1.0, %v987
    %v989 = vtanh.pop %v949
    %v990 = vmul.f32 %v973, %v796
    %v991 = vmul.f32 %v973, %v989
    %993 = vrot.lane.b32.xlu0 %v991, 64
    %v994 = vpop.permute.xlu0 %993
    %v996 = vadd.f32 %v990, %v994
    %v997 = vtanh.pop %v996
    %v998 = vmul.f32 %v988, %v997
    %v999 = vrot.slane %v899, 4
    %1000 = vrot.lane.b32.xlu0 %v999, 64
    %v1001 = vpop.permute.xlu0 %1000
    %v1002 = vsel %vm216, %v1001, 0
    %1004 = vmatpush.msra.mxu0 0.0
    %1005 = vmatpush.msra.mxu0 0.0
    %1006 = vmatpush.msra.mxu0 0.0
    %1007 = vmatpush.msra.mxu0 0.0
    %1008 = vmatpush.msra.mxu0 0.0
    %1009 = vmatpush.msra.mxu0 0.0
    %1010 = vmatpush.msra.mxu0 0.0
    %1011 = vmatpush.msra.mxu0 0.0
    %1012 = vmatpush.msra.mxu0 %v91
    %1013 = vmatpush.msra.mxu0 %v89
    %1014 = vmatpush.msra.mxu0 %v87
    %1015 = vmatpush.msra.mxu0 %v85
    %1016 = vmatpush.msra.mxu0 %v83
    %1017 = vmatpush.msra.mxu0 %v81
    %1018 = vmatpush.msra.mxu0 %v79
    %1019 = vmatpush.msra.mxu0 %v77
    %1020 = vmatmul.f32.gmra.mxu0 %v1002
    %v1021 = vpop.f32.mrf.mxu0
    %v1022 = vadd.f32 0.0, %v1021
    %1023 = vdwg.mxu0
    %1024 = vmatpush.msra.mxu0 0.0
    %1025 = vmatpush.msra.mxu0 0.0
    %1026 = vmatpush.msra.mxu0 0.0
    %1027 = vmatpush.msra.mxu0 0.0
    %1028 = vmatpush.msra.mxu0 0.0
    %1029 = vmatpush.msra.mxu0 0.0
    %1030 = vmatpush.msra.mxu0 0.0
    %1031 = vmatpush.msra.mxu0 0.0
    %1032 = vmatpush.msra.mxu0 %v92
    %1033 = vmatpush.msra.mxu0 %v90
    %1034 = vmatpush.msra.mxu0 %v88
    %1035 = vmatpush.msra.mxu0 %v86
    %1036 = vmatpush.msra.mxu0 %v84
    %1037 = vmatpush.msra.mxu0 %v82
    %1038 = vmatpush.msra.mxu0 %v80
    %1039 = vmatpush.msra.mxu0 %v78
    %1040 = vmatmul.f32.gmra.mxu0 %v1002
    %v1041 = vpop.f32.mrf.mxu0
    %v1042 = vadd.f32 0.0, %v1041
    %1043 = vdwg.mxu0
    %v1044 = vadd.f32 %v182, %v1022
    %v1045 = vadd.f32 %v211, %v1042
    %v1046 = vxor.u32 %v1044, 2147483648
    %v1047 = vxor.u32 %v1045, 2147483648
    %v1048 = vmul.f32 %v1046, 1.442695
    %v1049 = vpow.pop %v1048
    %v1050 = vmul.f32 %v1047, 1.442695
    %v1051 = vpow.pop %v1050
    %v1052 = vadd.f32 %v1049, 1.0
    %v1053 = vadd.f32 %v1051, 1.0
    %v1054 = vrcp.pop %v1052
    %v1055 = vmul.f32 %v1052, %v1054
    %v1056 = vsub.f32 1.0, %v1055
    %v1057 = vmul.f32 %v1054, %v1056
    %v1058 = vadd.f32 %v1054, %v1057
    %vm1059 = vweird.f32 %v1052
    %vm1060 = vweird.f32 %v1054
    %vm1061 = vmor %vm1059, %vm1060
    %v1062 = vsel %vm1061, %v1054, %v1058
    %v1063 = vand.u32 2147483647, %v1052
    %vm1064 = vcmp.eq.f32.partialorder %v1063, 8.507059e+37
    %v1065 = vand.u32 %v1052, 2147483648
    %v1066 = vor.u32 1.1754944e-38, %v1065
    %v1067 = vsel %vm1064, %v1066, %v1062
    %v1068 = vmul.f32 1.0, %v1067
    %v1069 = vrcp.pop %v1053
    %v1070 = vmul.f32 %v1053, %v1069
    %v1071 = vsub.f32 1.0, %v1070
    %v1072 = vmul.f32 %v1069, %v1071
    %v1073 = vadd.f32 %v1069, %v1072
    %vm1074 = vweird.f32 %v1053
    %vm1075 = vweird.f32 %v1069
    %vm1076 = vmor %vm1074, %vm1075
    %v1077 = vsel %vm1076, %v1069, %v1073
    %v1078 = vand.u32 2147483647, %v1053
    %vm1079 = vcmp.eq.f32.partialorder %v1078, 8.507059e+37
    %v1080 = vand.u32 %v1053, 2147483648
    %v1081 = vor.u32 1.1754944e-38, %v1080
    %v1082 = vsel %vm1079, %v1081, %v1077
    %v1083 = vmul.f32 1.0, %v1082
    %v1084 = vtanh.pop %v1045
    %v1086 = vrot.slane %v897, 4
    %v1088 = vmul.f32 %v1068, %v1086
    %v1089 = vmul.f32 %v1068, %v1084
    %1091 = vrot.lane.b32.xlu0 %v1089, 64
    %v1092 = vpop.permute.xlu0 %1091
    %v1094 = vadd.f32 %v1088, %v1092
    %v1095 = vtanh.pop %v1094
    %v1096 = vmul.f32 %v1083, %v1095
    %1098 = vrot.lane.b32.xlu0 %v1096, 64
    %v1099 = vpop.permute.xlu0 %1098
    %v1101 = vsel %vm216, %v1099, %v998
    %1102 = vmatpush.msra.mxu0 %v123
    %1103 = vmatpush.msra.mxu0 %v121
    %1104 = vmatpush.msra.mxu0 %v119
    %1105 = vmatpush.msra.mxu0 %v117
    %1106 = vmatpush.msra.mxu0 %v115
    %1107 = vmatpush.msra.mxu0 %v113
    %1108 = vmatpush.msra.mxu0 %v111
    %1109 = vmatpush.msra.mxu0 %v109
    %1110 = vmatpush.msra.mxu0 %v107
    %1111 = vmatpush.msra.mxu0 %v105
    %1112 = vmatpush.msra.mxu0 %v103
    %1113 = vmatpush.msra.mxu0 %v101
    %1114 = vmatpush.msra.mxu0 %v99
    %1115 = vmatpush.msra.mxu0 %v97
    %1116 = vmatpush.msra.mxu0 %v95
    %1117 = vmatpush.msra.mxu0 %v93
    %1118 = vmatmul.f32.gmra.mxu0 %v1101
    %v1119 = vpop.f32.mrf.mxu0
    %v1120 = vadd.f32 %v316, %v1119
    %1121 = vdwg.mxu0
    %1122 = vmatpush.msra.mxu0 %v124
    %1123 = vmatpush.msra.mxu0 %v122
    %1124 = vmatpush.msra.mxu0 %v120
    %1125 = vmatpush.msra.mxu0 %v118
    %1126 = vmatpush.msra.mxu0 %v116
    %1127 = vmatpush.msra.mxu0 %v114
    %1128 = vmatpush.msra.mxu0 %v112
    %1129 = vmatpush.msra.mxu0 %v110
    %1130 = vmatpush.msra.mxu0 %v108
    %1131 = vmatpush.msra.mxu0 %v106
    %1132 = vmatpush.msra.mxu0 %v104
    %1133 = vmatpush.msra.mxu0 %v102
    %1134 = vmatpush.msra.mxu0 %v100
    %1135 = vmatpush.msra.mxu0 %v98
    %1136 = vmatpush.msra.mxu0 %v96
    %1137 = vmatpush.msra.mxu0 %v94
    %1138 = vmatmul.f32.gmra.mxu0 %v1101
    %v1139 = vpop.f32.mrf.mxu0
    %v1140 = vadd.f32 %v317, %v1139
    %1141 = vdwg.mxu0
    %v1142 = vxor.u32 %v1120, 2147483648
    %v1143 = vxor.u32 %v1140, 2147483648
    %v1144 = vmul.f32 %v1142, 1.442695
    %v1145 = vpow.pop %v1144
    %v1146 = vmul.f32 %v1143, 1.442695
    %v1147 = vpow.pop %v1146
    %v1148 = vadd.f32 %v1145, 1.0
    %v1149 = vadd.f32 %v1147, 1.0
    %v1150 = vrcp.pop %v1148
    %v1151 = vmul.f32 %v1148, %v1150
    %v1152 = vsub.f32 1.0, %v1151
    %v1153 = vmul.f32 %v1150, %v1152
    %v1154 = vadd.f32 %v1150, %v1153
    %vm1155 = vweird.f32 %v1148
    %vm1156 = vweird.f32 %v1150
    %vm1157 = vmor %vm1155, %vm1156
    %v1158 = vsel %vm1157, %v1150, %v1154
    %v1159 = vand.u32 2147483647, %v1148
    %vm1160 = vcmp.eq.f32.partialorder %v1159, 8.507059e+37
    %v1161 = vand.u32 %v1148, 2147483648
    %v1162 = vor.u32 1.1754944e-38, %v1161
    %v1163 = vsel %vm1160, %v1162, %v1158
    %v1164 = vmul.f32 1.0, %v1163
    %v1165 = vrcp.pop %v1149
    %v1166 = vmul.f32 %v1149, %v1165
    %v1167 = vsub.f32 1.0, %v1166
    %v1168 = vmul.f32 %v1165, %v1167
    %v1169 = vadd.f32 %v1165, %v1168
    %vm1170 = vweird.f32 %v1149
    %vm1171 = vweird.f32 %v1165
    %vm1172 = vmor %vm1170, %vm1171
    %v1173 = vsel %vm1172, %v1165, %v1169
    %v1174 = vand.u32 2147483647, %v1149
    %vm1175 = vcmp.eq.f32.partialorder %v1174, 8.507059e+37
    %v1176 = vand.u32 %v1149, 2147483648
    %v1177 = vor.u32 1.1754944e-38, %v1176
    %v1178 = vsel %vm1175, %v1177, %v1173
    %v1179 = vmul.f32 1.0, %v1178
    %v1180 = vtanh.pop %v1140
    %v1181 = vmul.f32 %v1164, %v996
    %v1182 = vmul.f32 %v1164, %v1180
    %1184 = vrot.lane.b32.xlu0 %v1182, 64
    %v1185 = vpop.permute.xlu0 %1184
    %v1187 = vadd.f32 %v1181, %v1185
    %v1188 = vtanh.pop %v1187
    %v1189 = vmul.f32 %v1179, %v1188
    %v1190 = vsel %vm216, %v1099, 0
    %1192 = vmatpush.msra.mxu0 0.0
    %1193 = vmatpush.msra.mxu0 0.0
    %1194 = vmatpush.msra.mxu0 0.0
    %1195 = vmatpush.msra.mxu0 0.0
    %1196 = vmatpush.msra.mxu0 0.0
    %1197 = vmatpush.msra.mxu0 0.0
    %1198 = vmatpush.msra.mxu0 0.0
    %1199 = vmatpush.msra.mxu0 0.0
    %1200 = vmatpush.msra.mxu0 %v91
    %1201 = vmatpush.msra.mxu0 %v89
    %1202 = vmatpush.msra.mxu0 %v87
    %1203 = vmatpush.msra.mxu0 %v85
    %1204 = vmatpush.msra.mxu0 %v83
    %1205 = vmatpush.msra.mxu0 %v81
    %1206 = vmatpush.msra.mxu0 %v79
    %1207 = vmatpush.msra.mxu0 %v77
    %1208 = vmatmul.f32.gmra.mxu0 %v1190
    %v1209 = vpop.f32.mrf.mxu0
    %v1210 = vadd.f32 0.0, %v1209
    %1211 = vdwg.mxu0
    %1212 = vmatpush.msra.mxu0 0.0
    %1213 = vmatpush.msra.mxu0 0.0
    %1214 = vmatpush.msra.mxu0 0.0
    %1215 = vmatpush.msra.mxu0 0.0
    %1216 = vmatpush.msra.mxu0 0.0
    %1217 = vmatpush.msra.mxu0 0.0
    %1218 = vmatpush.msra.mxu0 0.0
    %1219 = vmatpush.msra.mxu0 0.0
    %1220 = vmatpush.msra.mxu0 %v92
    %1221 = vmatpush.msra.mxu0 %v90
    %1222 = vmatpush.msra.mxu0 %v88
    %1223 = vmatpush.msra.mxu0 %v86
    %1224 = vmatpush.msra.mxu0 %v84
    %1225 = vmatpush.msra.mxu0 %v82
    %1226 = vmatpush.msra.mxu0 %v80
    %1227 = vmatpush.msra.mxu0 %v78
    %1228 = vmatmul.f32.gmra.mxu0 %v1190
    %v1229 = vpop.f32.mrf.mxu0
    %v1230 = vadd.f32 0.0, %v1229
    %1231 = vdwg.mxu0
    %v1234 = vrot.slane %v1210, 4
    %v1235 = vrot.slane %v1230, 4
    %v1238 = vadd.f32 %v182, %v1234
    %v1239 = vadd.f32 %v211, %v1235
    %v1240 = vxor.u32 %v1238, 2147483648
    %v1241 = vxor.u32 %v1239, 2147483648
    %v1242 = vmul.f32 %v1240, 1.442695
    %v1243 = vpow.pop %v1242
    %v1244 = vmul.f32 %v1241, 1.442695
    %v1245 = vpow.pop %v1244
    %v1246 = vadd.f32 %v1243, 1.0
    %v1247 = vadd.f32 %v1245, 1.0
    %v1248 = vrcp.pop %v1246
    %v1249 = vmul.f32 %v1246, %v1248
    %v1250 = vsub.f32 1.0, %v1249
    %v1251 = vmul.f32 %v1248, %v1250
    %v1252 = vadd.f32 %v1248, %v1251
    %vm1253 = vweird.f32 %v1246
    %vm1254 = vweird.f32 %v1248
    %vm1255 = vmor %vm1253, %vm1254
    %v1256 = vsel %vm1255, %v1248, %v1252
    %v1257 = vand.u32 2147483647, %v1246
    %vm1258 = vcmp.eq.f32.partialorder %v1257, 8.507059e+37
    %v1259 = vand.u32 %v1246, 2147483648
    %v1260 = vor.u32 1.1754944e-38, %v1259
    %v1261 = vsel %vm1258, %v1260, %v1256
    %v1262 = vmul.f32 1.0, %v1261
    %v1263 = vrcp.pop %v1247
    %v1264 = vmul.f32 %v1247, %v1263
    %v1265 = vsub.f32 1.0, %v1264
    %v1266 = vmul.f32 %v1263, %v1265
    %v1267 = vadd.f32 %v1263, %v1266
    %vm1268 = vweird.f32 %v1247
    %vm1269 = vweird.f32 %v1263
    %vm1270 = vmor %vm1268, %vm1269
    %v1271 = vsel %vm1270, %v1263, %v1267
    %v1272 = vand.u32 2147483647, %v1247
    %vm1273 = vcmp.eq.f32.partialorder %v1272, 8.507059e+37
    %v1274 = vand.u32 %v1247, 2147483648
    %v1275 = vor.u32 1.1754944e-38, %v1274
    %v1276 = vsel %vm1273, %v1275, %v1271
    %v1277 = vmul.f32 1.0, %v1276
    %v1278 = vtanh.pop %v1239
    %v1280 = vrot.slane %v1094, 4
    %v1282 = vmul.f32 %v1262, %v1280
    %v1283 = vmul.f32 %v1262, %v1278
    %1285 = vrot.lane.b32.xlu0 %v1283, 64
    %v1286 = vpop.permute.xlu0 %1285
    %v1288 = vadd.f32 %v1282, %v1286
    %v1289 = vtanh.pop %v1288
    %v1290 = vmul.f32 %v1277, %v1289
    %1292 = vrot.lane.b32.xlu0 %v1290, 64
    %v1293 = vpop.permute.xlu0 %1292
    %v1296 = vrot.slane %v1189, 4
    %v1298 = vsel %vm216, %v1293, %v1296
    %v1300 = vrot.slane %v1298, 4
    %1302 = vmatpush.msra.mxu0 %v123
    %1303 = vmatpush.msra.mxu0 %v121
    %1304 = vmatpush.msra.mxu0 %v119
    %1305 = vmatpush.msra.mxu0 %v117
    %1306 = vmatpush.msra.mxu0 %v115
    %1307 = vmatpush.msra.mxu0 %v113
    %1308 = vmatpush.msra.mxu0 %v111
    %1309 = vmatpush.msra.mxu0 %v109
    %1310 = vmatpush.msra.mxu0 %v107
    %1311 = vmatpush.msra.mxu0 %v105
    %1312 = vmatpush.msra.mxu0 %v103
    %1313 = vmatpush.msra.mxu0 %v101
    %1314 = vmatpush.msra.mxu0 %v99
    %1315 = vmatpush.msra.mxu0 %v97
    %1316 = vmatpush.msra.mxu0 %v95
    %1317 = vmatpush.msra.mxu0 %v93
    %1318 = vmatmul.f32.gmra.mxu0 %v1300
    %v1319 = vpop.f32.mrf.mxu0
    %v1320 = vadd.f32 %v316, %v1319
    %1321 = vdwg.mxu0
    %1322 = vmatpush.msra.mxu0 %v124
    %1323 = vmatpush.msra.mxu0 %v122
    %1324 = vmatpush.msra.mxu0 %v120
    %1325 = vmatpush.msra.mxu0 %v118
    %1326 = vmatpush.msra.mxu0 %v116
    %1327 = vmatpush.msra.mxu0 %v114
    %1328 = vmatpush.msra.mxu0 %v112
    %1329 = vmatpush.msra.mxu0 %v110
    %1330 = vmatpush.msra.mxu0 %v108
    %1331 = vmatpush.msra.mxu0 %v106
    %1332 = vmatpush.msra.mxu0 %v104
    %1333 = vmatpush.msra.mxu0 %v102
    %1334 = vmatpush.msra.mxu0 %v100
    %1335 = vmatpush.msra.mxu0 %v98
    %1336 = vmatpush.msra.mxu0 %v96
    %1337 = vmatpush.msra.mxu0 %v94
    %1338 = vmatmul.f32.gmra.mxu0 %v1300
    %v1339 = vpop.f32.mrf.mxu0
    %v1340 = vadd.f32 %v317, %v1339
    %1341 = vdwg.mxu0
    %v1342 = vxor.u32 %v1320, 2147483648
    %v1343 = vxor.u32 %v1340, 2147483648
    %v1344 = vmul.f32 %v1342, 1.442695
    %v1345 = vpow.pop %v1344
    %v1346 = vmul.f32 %v1343, 1.442695
    %v1347 = vpow.pop %v1346
    %v1348 = vadd.f32 %v1345, 1.0
    %v1349 = vadd.f32 %v1347, 1.0
    %v1350 = vrcp.pop %v1348
    %v1351 = vmul.f32 %v1348, %v1350
    %v1352 = vsub.f32 1.0, %v1351
    %v1353 = vmul.f32 %v1350, %v1352
    %v1354 = vadd.f32 %v1350, %v1353
    %vm1355 = vweird.f32 %v1348
    %vm1356 = vweird.f32 %v1350
    %vm1357 = vmor %vm1355, %vm1356
    %v1358 = vsel %vm1357, %v1350, %v1354
    %v1359 = vand.u32 2147483647, %v1348
    %vm1360 = vcmp.eq.f32.partialorder %v1359, 8.507059e+37
    %v1361 = vand.u32 %v1348, 2147483648
    %v1362 = vor.u32 1.1754944e-38, %v1361
    %v1363 = vsel %vm1360, %v1362, %v1358
    %v1364 = vmul.f32 1.0, %v1363
    %v1365 = vrcp.pop %v1349
    %v1366 = vmul.f32 %v1349, %v1365
    %v1367 = vsub.f32 1.0, %v1366
    %v1368 = vmul.f32 %v1365, %v1367
    %v1369 = vadd.f32 %v1365, %v1368
    %vm1370 = vweird.f32 %v1349
    %vm1371 = vweird.f32 %v1365
    %vm1372 = vmor %vm1370, %vm1371
    %v1373 = vsel %vm1372, %v1365, %v1369
    %v1374 = vand.u32 2147483647, %v1349
    %vm1375 = vcmp.eq.f32.partialorder %v1374, 8.507059e+37
    %v1376 = vand.u32 %v1349, 2147483648
    %v1377 = vor.u32 1.1754944e-38, %v1376
    %v1378 = vsel %vm1375, %v1377, %v1373
    %v1379 = vmul.f32 1.0, %v1378
    %v1380 = vtanh.pop %v1340
    %v1381 = vmul.f32 %v1364, %v1187
    %v1382 = vmul.f32 %v1364, %v1380
    %1384 = vrot.lane.b32.xlu0 %v1382, 64
    %v1385 = vpop.permute.xlu0 %1384
    %v1387 = vadd.f32 %v1381, %v1385
    %v1388 = vtanh.pop %v1387
    %v1389 = vmul.f32 %v1379, %v1388
    %v1390 = vrot.slane %v1290, 4
    %1391 = vrot.lane.b32.xlu0 %v1390, 64
    %v1392 = vpop.permute.xlu0 %1391
    %v1393 = vsel %vm216, %v1392, 0
    %1395 = vmatpush.msra.mxu0 0.0
    %1396 = vmatpush.msra.mxu0 0.0
    %1397 = vmatpush.msra.mxu0 0.0
    %1398 = vmatpush.msra.mxu0 0.0
    %1399 = vmatpush.msra.mxu0 0.0
    %1400 = vmatpush.msra.mxu0 0.0
    %1401 = vmatpush.msra.mxu0 0.0
    %1402 = vmatpush.msra.mxu0 0.0
    %1403 = vmatpush.msra.mxu0 %v91
    %1404 = vmatpush.msra.mxu0 %v89
    %1405 = vmatpush.msra.mxu0 %v87
    %1406 = vmatpush.msra.mxu0 %v85
    %1407 = vmatpush.msra.mxu0 %v83
    %1408 = vmatpush.msra.mxu0 %v81
    %1409 = vmatpush.msra.mxu0 %v79
    %1410 = vmatpush.msra.mxu0 %v77
    %1411 = vmatmul.f32.gmra.mxu0 %v1393
    %v1412 = vpop.f32.mrf.mxu0
    %v1413 = vadd.f32 0.0, %v1412
    %1414 = vdwg.mxu0
    %1415 = vmatpush.msra.mxu0 0.0
    %1416 = vmatpush.msra.mxu0 0.0
    %1417 = vmatpush.msra.mxu0 0.0
    %1418 = vmatpush.msra.mxu0 0.0
    %1419 = vmatpush.msra.mxu0 0.0
    %1420 = vmatpush.msra.mxu0 0.0
    %1421 = vmatpush.msra.mxu0 0.0
    %1422 = vmatpush.msra.mxu0 0.0
    %1423 = vmatpush.msra.mxu0 %v92
    %1424 = vmatpush.msra.mxu0 %v90
    %1425 = vmatpush.msra.mxu0 %v88
    %1426 = vmatpush.msra.mxu0 %v86
    %1427 = vmatpush.msra.mxu0 %v84
    %1428 = vmatpush.msra.mxu0 %v82
    %1429 = vmatpush.msra.mxu0 %v80
    %1430 = vmatpush.msra.mxu0 %v78
    %1431 = vmatmul.f32.gmra.mxu0 %v1393
    %v1432 = vpop.f32.mrf.mxu0
    %v1433 = vadd.f32 0.0, %v1432
    %1434 = vdwg.mxu0
    %v1435 = vadd.f32 %v185, %v1413
    %v1436 = vadd.f32 %v214, %v1433
    %v1437 = vxor.u32 %v1435, 2147483648
    %v1438 = vxor.u32 %v1436, 2147483648
    %v1439 = vmul.f32 %v1437, 1.442695
    %v1440 = vpow.pop %v1439
    %v1441 = vmul.f32 %v1438, 1.442695
    %v1442 = vpow.pop %v1441
    %v1443 = vadd.f32 %v1440, 1.0
    %v1444 = vadd.f32 %v1442, 1.0
    %v1445 = vrcp.pop %v1443
    %v1446 = vmul.f32 %v1443, %v1445
    %v1447 = vsub.f32 1.0, %v1446
    %v1448 = vmul.f32 %v1445, %v1447
    %v1449 = vadd.f32 %v1445, %v1448
    %vm1450 = vweird.f32 %v1443
    %vm1451 = vweird.f32 %v1445
    %vm1452 = vmor %vm1450, %vm1451
    %v1453 = vsel %vm1452, %v1445, %v1449
    %v1454 = vand.u32 2147483647, %v1443
    %vm1455 = vcmp.eq.f32.partialorder %v1454, 8.507059e+37
    %v1456 = vand.u32 %v1443, 2147483648
    %v1457 = vor.u32 1.1754944e-38, %v1456
    %v1458 = vsel %vm1455, %v1457, %v1453
    %v1459 = vmul.f32 1.0, %v1458
    %v1460 = vrcp.pop %v1444
    %v1461 = vmul.f32 %v1444, %v1460
    %v1462 = vsub.f32 1.0, %v1461
    %v1463 = vmul.f32 %v1460, %v1462
    %v1464 = vadd.f32 %v1460, %v1463
    %vm1465 = vweird.f32 %v1444
    %vm1466 = vweird.f32 %v1460
    %vm1467 = vmor %vm1465, %vm1466
    %v1468 = vsel %vm1467, %v1460, %v1464
    %v1469 = vand.u32 2147483647, %v1444
    %vm1470 = vcmp.eq.f32.partialorder %v1469, 8.507059e+37
    %v1471 = vand.u32 %v1444, 2147483648
    %v1472 = vor.u32 1.1754944e-38, %v1471
    %v1473 = vsel %vm1470, %v1472, %v1468
    %v1474 = vmul.f32 1.0, %v1473
    %v1475 = vtanh.pop %v1436
    %v1477 = vrot.slane %v1288, 4
    %v1479 = vmul.f32 %v1459, %v1477
    %v1480 = vmul.f32 %v1459, %v1475
    %1482 = vrot.lane.b32.xlu0 %v1480, 64
    %v1483 = vpop.permute.xlu0 %1482
    %v1485 = vadd.f32 %v1479, %v1483
    %v1486 = vtanh.pop %v1485
    %v1487 = vmul.f32 %v1474, %v1486
    %1489 = vrot.lane.b32.xlu0 %v1487, 64
    %v1490 = vpop.permute.xlu0 %1489
    %v1492 = vsel %vm216, %v1490, %v1389
    %1493 = vmatpush.msra.mxu0 %v123
    %1494 = vmatpush.msra.mxu0 %v121
    %1495 = vmatpush.msra.mxu0 %v119
    %1496 = vmatpush.msra.mxu0 %v117
    %1497 = vmatpush.msra.mxu0 %v115
    %1498 = vmatpush.msra.mxu0 %v113
    %1499 = vmatpush.msra.mxu0 %v111
    %1500 = vmatpush.msra.mxu0 %v109
    %1501 = vmatpush.msra.mxu0 %v107
    %1502 = vmatpush.msra.mxu0 %v105
    %1503 = vmatpush.msra.mxu0 %v103
    %1504 = vmatpush.msra.mxu0 %v101
    %1505 = vmatpush.msra.mxu0 %v99
    %1506 = vmatpush.msra.mxu0 %v97
    %1507 = vmatpush.msra.mxu0 %v95
    %1508 = vmatpush.msra.mxu0 %v93
    %1509 = vmatmul.f32.gmra.mxu0 %v1492
    %v1510 = vpop.f32.mrf.mxu0
    %v1511 = vadd.f32 %v316, %v1510
    %1512 = vdwg.mxu0
    %1513 = vmatpush.msra.mxu0 %v124
    %1514 = vmatpush.msra.mxu0 %v122
    %1515 = vmatpush.msra.mxu0 %v120
    %1516 = vmatpush.msra.mxu0 %v118
    %1517 = vmatpush.msra.mxu0 %v116
    %1518 = vmatpush.msra.mxu0 %v114
    %1519 = vmatpush.msra.mxu0 %v112
    %1520 = vmatpush.msra.mxu0 %v110
    %1521 = vmatpush.msra.mxu0 %v108
    %1522 = vmatpush.msra.mxu0 %v106
    %1523 = vmatpush.msra.mxu0 %v104
    %1524 = vmatpush.msra.mxu0 %v102
    %1525 = vmatpush.msra.mxu0 %v100
    %1526 = vmatpush.msra.mxu0 %v98
    %1527 = vmatpush.msra.mxu0 %v96
    %1528 = vmatpush.msra.mxu0 %v94
    %1529 = vmatmul.f32.gmra.mxu0 %v1492
    %v1530 = vpop.f32.mrf.mxu0
    %v1531 = vadd.f32 %v317, %v1530
    %1532 = vdwg.mxu0
    %v1533 = vxor.u32 %v1511, 2147483648
    %v1534 = vxor.u32 %v1531, 2147483648
    %v1535 = vmul.f32 %v1533, 1.442695
    %v1536 = vpow.pop %v1535
    %v1537 = vmul.f32 %v1534, 1.442695
    %v1538 = vpow.pop %v1537
    %v1539 = vadd.f32 %v1536, 1.0
    %v1540 = vadd.f32 %v1538, 1.0
    %v1541 = vrcp.pop %v1539
    %v1542 = vmul.f32 %v1539, %v1541
    %v1543 = vsub.f32 1.0, %v1542
    %v1544 = vmul.f32 %v1541, %v1543
    %v1545 = vadd.f32 %v1541, %v1544
    %vm1546 = vweird.f32 %v1539
    %vm1547 = vweird.f32 %v1541
    %vm1548 = vmor %vm1546, %vm1547
    %v1549 = vsel %vm1548, %v1541, %v1545
    %v1550 = vand.u32 2147483647, %v1539
    %vm1551 = vcmp.eq.f32.partialorder %v1550, 8.507059e+37
    %v1552 = vand.u32 %v1539, 2147483648
    %v1553 = vor.u32 1.1754944e-38, %v1552
    %v1554 = vsel %vm1551, %v1553, %v1549
    %v1555 = vmul.f32 1.0, %v1554
    %v1556 = vrcp.pop %v1540
    %v1557 = vmul.f32 %v1540, %v1556
    %v1558 = vsub.f32 1.0, %v1557
    %v1559 = vmul.f32 %v1556, %v1558
    %v1560 = vadd.f32 %v1556, %v1559
    %vm1561 = vweird.f32 %v1540
    %vm1562 = vweird.f32 %v1556
    %vm1563 = vmor %vm1561, %vm1562
    %v1564 = vsel %vm1563, %v1556, %v1560
    %v1565 = vand.u32 2147483647, %v1540
    %vm1566 = vcmp.eq.f32.partialorder %v1565, 8.507059e+37
    %v1567 = vand.u32 %v1540, 2147483648
    %v1568 = vor.u32 1.1754944e-38, %v1567
    %v1569 = vsel %vm1566, %v1568, %v1564
    %v1570 = vmul.f32 1.0, %v1569
    %v1571 = vtanh.pop %v1531
    %v1572 = vmul.f32 %v1555, %v1387
    %v1573 = vmul.f32 %v1555, %v1571
    %1575 = vrot.lane.b32.xlu0 %v1573, 64
    %v1576 = vpop.permute.xlu0 %1575
    %v1578 = vadd.f32 %v1572, %v1576
    %v1579 = vtanh.pop %v1578
    %v1580 = vmul.f32 %v1570, %v1579
    %v1581 = vsel %vm216, %v1490, 0
    %1583 = vmatpush.msra.mxu0 0.0
    %1584 = vmatpush.msra.mxu0 0.0
    %1585 = vmatpush.msra.mxu0 0.0
    %1586 = vmatpush.msra.mxu0 0.0
    %1587 = vmatpush.msra.mxu0 0.0
    %1588 = vmatpush.msra.mxu0 0.0
    %1589 = vmatpush.msra.mxu0 0.0
    %1590 = vmatpush.msra.mxu0 0.0
    %1591 = vmatpush.msra.mxu0 %v91
    %1592 = vmatpush.msra.mxu0 %v89
    %1593 = vmatpush.msra.mxu0 %v87
    %1594 = vmatpush.msra.mxu0 %v85
    %1595 = vmatpush.msra.mxu0 %v83
    %1596 = vmatpush.msra.mxu0 %v81
    %1597 = vmatpush.msra.mxu0 %v79
    %1598 = vmatpush.msra.mxu0 %v77
    %1599 = vmatmul.f32.gmra.mxu0 %v1581
    %v1600 = vpop.f32.mrf.mxu0
    %v1601 = vadd.f32 0.0, %v1600
    %1602 = vdwg.mxu0
    %1603 = vmatpush.msra.mxu0 0.0
    %1604 = vmatpush.msra.mxu0 0.0
    %1605 = vmatpush.msra.mxu0 0.0
    %1606 = vmatpush.msra.mxu0 0.0
    %1607 = vmatpush.msra.mxu0 0.0
    %1608 = vmatpush.msra.mxu0 0.0
    %1609 = vmatpush.msra.mxu0 0.0
    %1610 = vmatpush.msra.mxu0 0.0
    %1611 = vmatpush.msra.mxu0 %v92
    %1612 = vmatpush.msra.mxu0 %v90
    %1613 = vmatpush.msra.mxu0 %v88
    %1614 = vmatpush.msra.mxu0 %v86
    %1615 = vmatpush.msra.mxu0 %v84
    %1616 = vmatpush.msra.mxu0 %v82
    %1617 = vmatpush.msra.mxu0 %v80
    %1618 = vmatpush.msra.mxu0 %v78
    %1619 = vmatmul.f32.gmra.mxu0 %v1581
    %v1620 = vpop.f32.mrf.mxu0
    %v1621 = vadd.f32 0.0, %v1620
    %1622 = vdwg.mxu0
    %v1625 = vrot.slane %v1601, 4
    %v1626 = vrot.slane %v1621, 4
    %v1629 = vadd.f32 %v185, %v1625
    %v1630 = vadd.f32 %v214, %v1626
    %v1631 = vxor.u32 %v1629, 2147483648
    %v1632 = vxor.u32 %v1630, 2147483648
    %v1633 = vmul.f32 %v1631, 1.442695
    %v1634 = vpow.pop %v1633
    %v1635 = vmul.f32 %v1632, 1.442695
    %v1636 = vpow.pop %v1635
    %v1637 = vadd.f32 %v1634, 1.0
    %v1638 = vadd.f32 %v1636, 1.0
    %v1639 = vrcp.pop %v1637
    %v1640 = vmul.f32 %v1637, %v1639
    %v1641 = vsub.f32 1.0, %v1640
    %v1642 = vmul.f32 %v1639, %v1641
    %v1643 = vadd.f32 %v1639, %v1642
    %vm1644 = vweird.f32 %v1637
    %vm1645 = vweird.f32 %v1639
    %vm1646 = vmor %vm1644, %vm1645
    %v1647 = vsel %vm1646, %v1639, %v1643
    %v1648 = vand.u32 2147483647, %v1637
    %vm1649 = vcmp.eq.f32.partialorder %v1648, 8.507059e+37
    %v1650 = vand.u32 %v1637, 2147483648
    %v1651 = vor.u32 1.1754944e-38, %v1650
    %v1652 = vsel %vm1649, %v1651, %v1647
    %v1653 = vmul.f32 1.0, %v1652
    %v1654 = vrcp.pop %v1638
    %v1655 = vmul.f32 %v1638, %v1654
    %v1656 = vsub.f32 1.0, %v1655
    %v1657 = vmul.f32 %v1654, %v1656
    %v1658 = vadd.f32 %v1654, %v1657
    %vm1659 = vweird.f32 %v1638
    %vm1660 = vweird.f32 %v1654
    %vm1661 = vmor %vm1659, %vm1660
    %v1662 = vsel %vm1661, %v1654, %v1658
    %v1663 = vand.u32 2147483647, %v1638
    %vm1664 = vcmp.eq.f32.partialorder %v1663, 8.507059e+37
    %v1665 = vand.u32 %v1638, 2147483648
    %v1666 = vor.u32 1.1754944e-38, %v1665
    %v1667 = vsel %vm1664, %v1666, %v1662
    %v1668 = vmul.f32 1.0, %v1667
    %v1669 = vtanh.pop %v1630
    %v1671 = vrot.slane %v1485, 4
    %v1673 = vmul.f32 %v1653, %v1671
    %v1674 = vmul.f32 %v1653, %v1669
    %1676 = vrot.lane.b32.xlu0 %v1674, 64
    %v1677 = vpop.permute.xlu0 %1676
    %v1679 = vadd.f32 %v1673, %v1677
    %v1680 = vtanh.pop %v1679
    %v1681 = vmul.f32 %v1668, %v1680
    %1683 = vrot.lane.b32.xlu0 %v1681, 64
    %v1684 = vpop.permute.xlu0 %1683
    %v1687 = vrot.slane %v1580, 4
    %v1689 = vsel %vm216, %v1684, %v1687
    %v1691 = vrot.slane %v1689, 4
    %1693 = vmatpush.msra.mxu0 %v123
    %1694 = vmatpush.msra.mxu0 %v121
    %1695 = vmatpush.msra.mxu0 %v119
    %1696 = vmatpush.msra.mxu0 %v117
    %1697 = vmatpush.msra.mxu0 %v115
    %1698 = vmatpush.msra.mxu0 %v113
    %1699 = vmatpush.msra.mxu0 %v111
    %1700 = vmatpush.msra.mxu0 %v109
    %1701 = vmatpush.msra.mxu0 %v107
    %1702 = vmatpush.msra.mxu0 %v105
    %1703 = vmatpush.msra.mxu0 %v103
    %1704 = vmatpush.msra.mxu0 %v101
    %1705 = vmatpush.msra.mxu0 %v99
    %1706 = vmatpush.msra.mxu0 %v97
    %1707 = vmatpush.msra.mxu0 %v95
    %1708 = vmatpush.msra.mxu0 %v93
    %1709 = vmatmul.f32.gmra.mxu0 %v1691
    %v1710 = vpop.f32.mrf.mxu0
    %v1711 = vadd.f32 %v316, %v1710
    %1712 = vdwg.mxu0
    %1713 = vmatpush.msra.mxu0 %v124
    %1714 = vmatpush.msra.mxu0 %v122
    %1715 = vmatpush.msra.mxu0 %v120
    %1716 = vmatpush.msra.mxu0 %v118
    %1717 = vmatpush.msra.mxu0 %v116
    %1718 = vmatpush.msra.mxu0 %v114
    %1719 = vmatpush.msra.mxu0 %v112
    %1720 = vmatpush.msra.mxu0 %v110
    %1721 = vmatpush.msra.mxu0 %v108
    %1722 = vmatpush.msra.mxu0 %v106
    %1723 = vmatpush.msra.mxu0 %v104
    %1724 = vmatpush.msra.mxu0 %v102
    %1725 = vmatpush.msra.mxu0 %v100
    %1726 = vmatpush.msra.mxu0 %v98
    %1727 = vmatpush.msra.mxu0 %v96
    %1728 = vmatpush.msra.mxu0 %v94
    %1729 = vmatmul.f32.gmra.mxu0 %v1691
    %v1730 = vpop.f32.mrf.mxu0
    %v1731 = vadd.f32 %v317, %v1730
    %1732 = vdwg.mxu0
    %v1733 = vxor.u32 %v1711, 2147483648
    %v1734 = vxor.u32 %v1731, 2147483648
    %v1735 = vmul.f32 %v1733, 1.442695
    %v1736 = vpow.pop %v1735
    %v1737 = vmul.f32 %v1734, 1.442695
    %v1738 = vpow.pop %v1737
    %v1739 = vadd.f32 %v1736, 1.0
    %v1740 = vadd.f32 %v1738, 1.0
    %v1741 = vrcp.pop %v1739
    %v1742 = vmul.f32 %v1739, %v1741
    %v1743 = vsub.f32 1.0, %v1742
    %v1744 = vmul.f32 %v1741, %v1743
    %v1745 = vadd.f32 %v1741, %v1744
    %vm1746 = vweird.f32 %v1739
    %vm1747 = vweird.f32 %v1741
    %vm1748 = vmor %vm1746, %vm1747
    %v1749 = vsel %vm1748, %v1741, %v1745
    %v1750 = vand.u32 2147483647, %v1739
    %vm1751 = vcmp.eq.f32.partialorder %v1750, 8.507059e+37
    %v1752 = vand.u32 %v1739, 2147483648
    %v1753 = vor.u32 1.1754944e-38, %v1752
    %v1754 = vsel %vm1751, %v1753, %v1749
    %v1755 = vmul.f32 1.0, %v1754
    %v1756 = vrcp.pop %v1740
    %v1757 = vmul.f32 %v1740, %v1756
    %v1758 = vsub.f32 1.0, %v1757
    %v1759 = vmul.f32 %v1756, %v1758
    %v1760 = vadd.f32 %v1756, %v1759
    %vm1761 = vweird.f32 %v1740
    %vm1762 = vweird.f32 %v1756
    %vm1763 = vmor %vm1761, %vm1762
    %v1764 = vsel %vm1763, %v1756, %v1760
    %v1765 = vand.u32 2147483647, %v1740
    %vm1766 = vcmp.eq.f32.partialorder %v1765, 8.507059e+37
    %v1767 = vand.u32 %v1740, 2147483648
    %v1768 = vor.u32 1.1754944e-38, %v1767
    %v1769 = vsel %vm1766, %v1768, %v1764
    %v1770 = vmul.f32 1.0, %v1769
    %v1771 = vtanh.pop %v1731
    %v1772 = vmul.f32 %v1755, %v1578
    %v1773 = vmul.f32 %v1755, %v1771
    %1775 = vrot.lane.b32.xlu0 %v1773, 64
    %v1776 = vpop.permute.xlu0 %1775
    %v1778 = vadd.f32 %v1772, %v1776
    %v1779 = vtanh.pop %v1778
    %v1780 = vmul.f32 %v1770, %v1779
    %v1781 = vld [vmem:[#allocation7] sm:$0xff]
    %v1782 = vld [vmem:[#allocation7 + $0x8] sm:$0xff]
    %v1783 = vld [vmem:[#allocation7 + $0x10] sm:$0xff]
    %v1784 = vld [vmem:[#allocation7 + $0x18] sm:$0xff]
    %v1785 = vld [vmem:[#allocation7 + $0x20] sm:$0xff]
    %v1786 = vld [vmem:[#allocation7 + $0x28] sm:$0xff]
    %v1787 = vld [vmem:[#allocation7 + $0x30] sm:$0xff]
    %v1788 = vld [vmem:[#allocation7 + $0x38] sm:$0xff]
    %v1789 = vld [vmem:[%s7] sm:$0x1]
    %v1791 = vperm.slane %v1789, 0
    %1794 = vrot.lane.b32.xlu0 %v1780, 64
    %v1795 = vpop.permute.xlu0 %1794
    %v1796 = vsel %vm216, %v1795, 0
    %1798 = vmatpush.msra.mxu0 0.0
    %1799 = vmatpush.msra.mxu0 0.0
    %1800 = vmatpush.msra.mxu0 0.0
    %1801 = vmatpush.msra.mxu0 0.0
    %1802 = vmatpush.msra.mxu0 0.0
    %1803 = vmatpush.msra.mxu0 0.0
    %1804 = vmatpush.msra.mxu0 0.0
    %1805 = vmatpush.msra.mxu0 0.0
    %1806 = vmatpush.msra.mxu0 %v1788
    %1807 = vmatpush.msra.mxu0 %v1787
    %1808 = vmatpush.msra.mxu0 %v1786
    %1809 = vmatpush.msra.mxu0 %v1785
    %1810 = vmatpush.msra.mxu0 %v1784
    %1811 = vmatpush.msra.mxu0 %v1783
    %1812 = vmatpush.msra.mxu0 %v1782
    %1813 = vmatpush.msra.mxu0 %v1781
    %1814 = vmatmul.f32.gmra.mxu0 %v1796
    %v1815 = vpop.f32.mrf.mxu0
    %v1816 = vadd.f32 %v1791, %v1815
    %1817 = vdwg.mxu0
    %1818 = vst [vmem:[#allocation8] sm:$0xf] %v1816
    // Predicated region
    $region46: #{tpu_custom_call.1} parent=1 // pred_check
      _
    $region47: #{tpu_custom_call.1} parent=1 // pred_check_branch
      %1820 = sbr.rel (0) target = $region49
    $region48: #{tpu_custom_call.1} parent=1 // pred_region
      %1822 = vsyncadd [#allocation4], 0
      %s1824 = sshll.u32 [#allocation8], 4
      %s1825 = int_to_ptr.vmem [resolvable:$true] %s1824
      %s1826 = sshll.u32 %s8, 4
      %s1827 = int_to_ptr.hbm [resolvable:$true] %s1826
      %1829 = dma.vmem_to_hbm [thread:$0]  %s1825, 64, %s1827, [#allocation4]
    $region49: #{tpu_custom_call.1} parent=1 // pred_fallthru
      _
    // Predicated region
    $region50: #{tpu_custom_call.1} parent=1 // pred_check
      _
    $region51: #{tpu_custom_call.1} parent=1 // pred_check_branch
      %1831 = sbr.rel (0) target = $region53
    $region52: #{tpu_custom_call.1} parent=1 // pred_region
      %1833 = dma.done [#allocation4], 64
    $region53: #{tpu_custom_call.1} parent=1 // pred_fallthru
      _
    %1834 = vsyncpa [#allocation3], 1
    %1835 = vsyncpa [#allocation6], 1
    %1836 = vsyncpa [#allocation4], 1

</llo_original>
